<compile_context>
chip_gen: v7x
topology: tpu7x:2x2x1
jax: 0.10.0
libtpu: 0.0.40
codegen_flags: <defaults>
</compile_context>

<pallas_src>
import functools

import numpy as np

import jax
import jax.numpy as jnp
from jax import lax
from jax.experimental import pallas as pl
from jax.experimental.pallas import tpu as pltpu


# ------------------------- Pallas kernel -------------------------------------


def _silu(x):
    # x * sigmoid(x); exp and the approximate reciprocal both land in the EUP
    # slot, leaving the VALU slot (saturated by the pooling stage) alone.
    return x * pl.reciprocal(1.0 + jnp.exp(-x), approx=True)


def _sppf_kernel(x_ref, w_in_ref, w_out_ref, bias_ref, o_ref, *, shifts_w, shifts_h):
    """Fused SPPF forward over one (Cin, L) slab, L = N*H*W on lanes.

    x_ref    : (Cin, L)                     f32   channels on sublanes
    w_in_ref : (C_, Cin)                    bf16  conv_in 1x1 weight
    w_out_ref: (4, Cout, C_)                bf16  conv_out weight, split per branch
    bias_ref : (len(shifts_w)+len(shifts_h), L) f32  {0,-inf} boundary bias planes
    o_ref    : (Cout, L)                    f32
    """
    f32 = jnp.float32
    bf16 = jnp.bfloat16

    # ---- conv_in (1x1, no bias) + SiLU : bf16 MXU matmul, f32 accumulate.
    y = _silu(jnp.dot(w_in_ref[...], x_ref[...].astype(bf16),
                      preferred_element_type=f32))

    bias = bias_ref[...]              # (4*radius, L), one sublane row per shift
    nw = len(shifts_w)

    def maxpool(v):
        # Separable (2r+1)x(2r+1) stride-1 max pool with implicit -inf padding:
        # W-direction (row) max, then H-direction (column) max of the row maxima.
        # Rolls are XLU lane rotations; out-of-window / cross-batch lanes are
        # knocked out by adding the precomputed -inf bias (sublane broadcast).
        r = v
        for k, s in enumerate(shifts_w):
            r = jnp.maximum(r, pltpu.roll(v, s, axis=1) + bias[k:k + 1, :])
        c = r
        for k, s in enumerate(shifts_h):
            c = jnp.maximum(c, pltpu.roll(r, s, axis=1) + bias[nw + k:nw + k + 1, :])
        return c

    # ---- conv_out (1x1) + SiLU as 4 accumulating partial matmuls: the
    # concatenated (4*C_, L) activation is never materialized and each branch
    # is free for reuse/death as soon as it has been fed to the MXU.
    acc = jnp.dot(w_out_ref[0], y.astype(bf16), preferred_element_type=f32)
    for i in range(1, 4):
        y = maxpool(y)                                    # y1, y2, y3 in turn
        acc += jnp.dot(w_out_ref[i], y.astype(bf16), preferred_element_type=f32)

    o_ref[...] = _silu(acc).astype(o_ref.dtype)


# ------------------------- wrapper --------------------------------------------


def _boundary_bias(N, H, W, radius):
    """Trace-time {0, -inf} bias planes, one lane row per roll shift.

    pltpu.roll(v, s, axis=-1)[p] == v[(p - s) % L] (jnp.roll convention), so for
    window offset d the element arriving at lane p comes from p - d (W pass) or
    p - d*W (H pass).  It is a genuine in-window neighbour iff the source column
    / row stays inside the same image row / column of the SAME batch element;
    otherwise the plane carries -inf and the term drops out of the max.
    """
    HW = H * W
    L = N * HW
    p = np.arange(L)
    w_p = p % W                      # within-row column
    h_p = (p % HW) // W              # within-image row
    offs = [d for d in range(-radius, radius + 1) if d != 0]
    rows = []
    for d in offs:                   # W-direction shifts: source column = w - d
        rows.append(np.where((w_p - d >= 0) & (w_p - d < W), 0.0, -np.inf))
    for d in offs:                   # H-direction shifts: source row = h - d
        rows.append(np.where((h_p - d >= 0) & (h_p - d < H), 0.0, -np.inf))
    bias = np.stack(rows).astype(np.float32)              # (4*radius, L)
    shifts_w = tuple(d % L for d in offs)
    shifts_h = tuple((d * W) % L for d in offs)
    return bias, shifts_w, shifts_h


def sppf_forward(kparams, x_nchw, pool_size=5):
    """SPPF eval-mode forward.  x_nchw: (N, Cin, H, W) f32 -> (N, Cout, H, W) f32."""
    assert pool_size % 2 == 1, "pool_size must be odd for same-size output"
    w_in = kparams["w_in"]           # (C_,  Cin)    bf16
    w_out4 = kparams["w_out4"]       # (4, Cout, C_) bf16
    N, Cin, H, W = x_nchw.shape
    Cout = w_out4.shape[1]
    radius = pool_size // 2
    assert H > 2 * radius and W > 2 * radius, "feature map smaller than pool window"
    L = N * H * W

    # Demo-regime layout: fold the batch into the lane dimension so a single
    # kernel invocation processes everything (per-image HW=256 gridded per
    # batch element would be overhead-bound).  Channels stay on sublanes and
    # the output last dim is N*H*W -> lane-dense, unmasked stores.
    x2d = jnp.transpose(x_nchw, (1, 0, 2, 3)).reshape(Cin, L)

    bias, shifts_w, shifts_h = _boundary_bias(N, H, W, radius)
    kernel = functools.partial(_sppf_kernel, shifts_w=shifts_w, shifts_h=shifts_h)

    out2d = pl.pallas_call(
        kernel,
        out_shape=jax.ShapeDtypeStruct((Cout, L), x_nchw.dtype),
        in_specs=[pl.BlockSpec(memory_space=pltpu.MemorySpace.VMEM)
                  for _ in range(4)],
        out_specs=pl.BlockSpec(memory_space=pltpu.MemorySpace.VMEM),
    )(x2d, w_in, w_out4, jnp.asarray(bias))

    return jnp.transpose(out2d.reshape(Cout, N, H, W), (1, 0, 2, 3))


# ------------------------- parameter init & plain-JAX reference ---------------


def init_params(key, c_in, c_out):
    """Deterministic synthetic f32 weights (shapes follow the PyTorch __init__)."""
    c_ = c_in // 2
    k1, k2 = jax.random.split(key)
    # torch conv weights (cout, cin, 1, 1) squeezed to (cout, cin)
    w_in = jax.random.normal(k1, (c_, c_in), jnp.float32) / jnp.sqrt(c_in)
    w_out = jax.random.normal(k2, (c_out, 4 * c_), jnp.float32) / jnp.sqrt(4.0 * c_)
    return dict(conv_in=w_in, conv_out=w_out)


def prepare_kernel_params(params):
    """One-time conversion to kernel-ready weights: bf16 cast + branch split."""
    w_in = params["conv_in"].astype(jnp.bfloat16)                      # (C_, Cin)
    c_out, four_c = params["conv_out"].shape
    c_ = four_c // 4
    # (Cout, 4*C_) -> (4, Cout, C_), branch-major to match [y0, y1, y2, y3].
    w_out4 = params["conv_out"].reshape(c_out, 4, c_).transpose(1, 0, 2)
    return dict(w_in=w_in, w_out4=w_out4.astype(jnp.bfloat16))


def reference_forward(params, x_nchw, pool_size=5):
    w_in, w_out = params["conv_in"], params["conv_out"]
    pad = pool_size // 2

    def silu(x):
        return x * jax.nn.sigmoid(x)

    def pw(x, w):   # 1x1 conv (no bias) + SiLU, NCHW
        return silu(jnp.einsum("oc,nchw->nohw", w, x))

    def pool(x):    # MaxPool2d(pool_size, stride=1, padding=pad), implicit -inf pad
        return lax.reduce_window(
            x, -jnp.inf, lax.max,
            window_dimensions=(1, 1, pool_size, pool_size),
            window_strides=(1, 1, 1, 1),
            padding=((0, 0), (0, 0), (pad, pad), (pad, pad)))

    y = pw(x_nchw, w_in)
    y1 = pool(y)
    y2 = pool(y1)
    y3 = pool(y2)
    return pw(jnp.concatenate([y, y1, y2, y3], axis=1), w_out)


# ------------------------- main ------------------------------------------------

if __name__ == "__main__":
    key = jax.random.PRNGKey(0)
    k_x, k_p = jax.random.split(key)

    N, C_IN, H, W = 2, 16, 16, 16
    C_OUT, POOL = 32, 5

    x = jax.random.normal(k_x, (N, C_IN, H, W), jnp.float32)   # NCHW, like PyTorch
    params = init_params(k_p, C_IN, C_OUT)
    kparams = prepare_kernel_params(params)                    # bf16 cast: once

    fwd = jax.jit(functools.partial(sppf_forward, kparams, pool_size=POOL))
    out = jax.block_until_ready(fwd(x))
    assert out.shape == (N, C_OUT, H, W), out.shape

    ref = reference_forward(params, x, POOL)
    # bf16 MXU inputs (f32 accumulate) + EUP-approx sigmoid -> small relative error.
    err = float(jnp.max(jnp.abs(out - ref) / (1.0 + jnp.abs(ref))))
    assert err < 4e-2, f"max rel err {err}"

    print("KERNEL_OK")
</pallas_src>

<mosaic_0001>
module attributes {stable_mosaic.version = 11 : i64} {
  func.func @_sppf_kernel(%arg0: memref<16x512xf32, #tpu.memory_space<vmem>>, %arg1: memref<8x16xbf16, #tpu.memory_space<vmem>>, %arg2: memref<4x32x8xbf16, #tpu.memory_space<vmem>>, %arg3: memref<8x512xf32, #tpu.memory_space<vmem>>, %arg4: memref<32x512xf32, #tpu.memory_space<vmem>>) attributes {dimension_semantics = [], scalar_prefetch = 0 : i64, scratch_operands = 0 : i64, tpu.core_type = #tpu.core_type<tc>} {
    %c0 = arith.constant 0 : index
    %c0_0 = arith.constant 0 : index
    %0 = vector.load %arg1[%c0, %c0_0] : memref<8x16xbf16, #tpu.memory_space<vmem>>, vector<8x16xbf16>
    %c0_1 = arith.constant 0 : index
    %c0_2 = arith.constant 0 : index
    %1 = vector.load %arg0[%c0_1, %c0_2] : memref<16x512xf32, #tpu.memory_space<vmem>>, vector<16x512xf32>
    %2 = arith.truncf %1 : vector<16x512xf32> to vector<16x512xbf16>
    %cst = arith.constant dense<0.000000e+00> : vector<8x512xf32>
    %3 = tpu.matmul %0, %2, %cst {dimension_numbers = #tpu.dot_dimension_numbers<[1], [0], [0], [1], [0, 0, 1, 1], [], []>} : vector<8x16xbf16>, vector<16x512xbf16>, vector<8x512xf32> -> vector<8x512xf32>
    %cst_3 = arith.constant 0.000000e+00 : f32
    %4 = vector.broadcast %cst_3 : f32 to vector<8x512xf32>
    %5 = arith.subf %4, %3 : vector<8x512xf32>
    %6 = math.exp %5 : vector<8x512xf32>
    %cst_4 = arith.constant 1.000000e+00 : f32
    %7 = vector.broadcast %cst_4 : f32 to vector<8x512xf32>
    %8 = arith.addf %7, %6 : vector<8x512xf32>
    %9 = tpu.reciprocal %8 {approx = true} : vector<8x512xf32> -> vector<8x512xf32>
    %10 = arith.mulf %3, %9 : vector<8x512xf32>
    %c0_5 = arith.constant 0 : index
    %c0_6 = arith.constant 0 : index
    %11 = vector.load %arg3[%c0_5, %c0_6] : memref<8x512xf32, #tpu.memory_space<vmem>>, vector<8x512xf32>
    %c0_7 = arith.constant 0 : index
    %c0_8 = arith.constant 0 : index
    %c0_9 = arith.constant 0 : index
    %12 = vector.load %arg2[%c0_7, %c0_8, %c0_9] : memref<4x32x8xbf16, #tpu.memory_space<vmem>>, vector<1x32x8xbf16>
    %13 = vector.shape_cast %12 : vector<1x32x8xbf16> to vector<32x8xbf16>
    %14 = arith.truncf %10 : vector<8x512xf32> to vector<8x512xbf16>
    %cst_10 = arith.constant dense<0.000000e+00> : vector<32x512xf32>
    %15 = tpu.matmul %13, %14, %cst_10 {dimension_numbers = #tpu.dot_dimension_numbers<[1], [0], [0], [1], [0, 0, 1, 1], [], []>} : vector<32x8xbf16>, vector<8x512xbf16>, vector<32x512xf32> -> vector<32x512xf32>
    %c510_i32 = arith.constant 510 : i32
    %16 = tpu.dynamic_rotate %10 by %c510_i32 dim 1 : vector<8x512xf32>, i32 -> vector<8x512xf32>
    %17 = vector.extract_strided_slice %11 {offsets = [0, 0], sizes = [1, 512], strides = [1, 1]} : vector<8x512xf32> to vector<1x512xf32>
    %18 = vector.broadcast %17 : vector<1x512xf32> to vector<8x512xf32>
    %19 = arith.addf %16, %18 : vector<8x512xf32>
    %20 = arith.maximumf %10, %19 : vector<8x512xf32>
    %c511_i32 = arith.constant 511 : i32
    %21 = tpu.dynamic_rotate %10 by %c511_i32 dim 1 : vector<8x512xf32>, i32 -> vector<8x512xf32>
    %22 = vector.extract_strided_slice %11 {offsets = [1, 0], sizes = [1, 512], strides = [1, 1]} : vector<8x512xf32> to vector<1x512xf32>
    %23 = vector.broadcast %22 : vector<1x512xf32> to vector<8x512xf32>
    %24 = arith.addf %21, %23 : vector<8x512xf32>
    %25 = arith.maximumf %20, %24 : vector<8x512xf32>
    %c1_i32 = arith.constant 1 : i32
    %26 = tpu.dynamic_rotate %10 by %c1_i32 dim 1 : vector<8x512xf32>, i32 -> vector<8x512xf32>
    %27 = vector.extract_strided_slice %11 {offsets = [2, 0], sizes = [1, 512], strides = [1, 1]} : vector<8x512xf32> to vector<1x512xf32>
    %28 = vector.broadcast %27 : vector<1x512xf32> to vector<8x512xf32>
    %29 = arith.addf %26, %28 : vector<8x512xf32>
    %30 = arith.maximumf %25, %29 : vector<8x512xf32>
    %c2_i32 = arith.constant 2 : i32
    %31 = tpu.dynamic_rotate %10 by %c2_i32 dim 1 : vector<8x512xf32>, i32 -> vector<8x512xf32>
    %32 = vector.extract_strided_slice %11 {offsets = [3, 0], sizes = [1, 512], strides = [1, 1]} : vector<8x512xf32> to vector<1x512xf32>
    %33 = vector.broadcast %32 : vector<1x512xf32> to vector<8x512xf32>
    %34 = arith.addf %31, %33 : vector<8x512xf32>
    %35 = arith.maximumf %30, %34 : vector<8x512xf32>
    %c480_i32 = arith.constant 480 : i32
    %36 = tpu.dynamic_rotate %35 by %c480_i32 dim 1 : vector<8x512xf32>, i32 -> vector<8x512xf32>
    %37 = vector.extract_strided_slice %11 {offsets = [4, 0], sizes = [1, 512], strides = [1, 1]} : vector<8x512xf32> to vector<1x512xf32>
    %38 = vector.broadcast %37 : vector<1x512xf32> to vector<8x512xf32>
    %39 = arith.addf %36, %38 : vector<8x512xf32>
    %40 = arith.maximumf %35, %39 : vector<8x512xf32>
    %c496_i32 = arith.constant 496 : i32
    %41 = tpu.dynamic_rotate %35 by %c496_i32 dim 1 : vector<8x512xf32>, i32 -> vector<8x512xf32>
    %42 = vector.extract_strided_slice %11 {offsets = [5, 0], sizes = [1, 512], strides = [1, 1]} : vector<8x512xf32> to vector<1x512xf32>
    %43 = vector.broadcast %42 : vector<1x512xf32> to vector<8x512xf32>
    %44 = arith.addf %41, %43 : vector<8x512xf32>
    %45 = arith.maximumf %40, %44 : vector<8x512xf32>
    %c16_i32 = arith.constant 16 : i32
    %46 = tpu.dynamic_rotate %35 by %c16_i32 dim 1 : vector<8x512xf32>, i32 -> vector<8x512xf32>
    %47 = vector.extract_strided_slice %11 {offsets = [6, 0], sizes = [1, 512], strides = [1, 1]} : vector<8x512xf32> to vector<1x512xf32>
    %48 = vector.broadcast %47 : vector<1x512xf32> to vector<8x512xf32>
    %49 = arith.addf %46, %48 : vector<8x512xf32>
    %50 = arith.maximumf %45, %49 : vector<8x512xf32>
    %c32_i32 = arith.constant 32 : i32
    %51 = tpu.dynamic_rotate %35 by %c32_i32 dim 1 : vector<8x512xf32>, i32 -> vector<8x512xf32>
    %52 = vector.extract_strided_slice %11 {offsets = [7, 0], sizes = [1, 512], strides = [1, 1]} : vector<8x512xf32> to vector<1x512xf32>
    %53 = vector.broadcast %52 : vector<1x512xf32> to vector<8x512xf32>
    %54 = arith.addf %51, %53 : vector<8x512xf32>
    %55 = arith.maximumf %50, %54 : vector<8x512xf32>
    %c1 = arith.constant 1 : index
    %c0_11 = arith.constant 0 : index
    %c0_12 = arith.constant 0 : index
    %56 = vector.load %arg2[%c1, %c0_11, %c0_12] : memref<4x32x8xbf16, #tpu.memory_space<vmem>>, vector<1x32x8xbf16>
    %57 = vector.shape_cast %56 : vector<1x32x8xbf16> to vector<32x8xbf16>
    %58 = arith.truncf %55 : vector<8x512xf32> to vector<8x512xbf16>
    %cst_13 = arith.constant dense<0.000000e+00> : vector<32x512xf32>
    %59 = tpu.matmul %57, %58, %cst_13 {dimension_numbers = #tpu.dot_dimension_numbers<[1], [0], [0], [1], [0, 0, 1, 1], [], []>} : vector<32x8xbf16>, vector<8x512xbf16>, vector<32x512xf32> -> vector<32x512xf32>
    %60 = arith.addf %15, %59 : vector<32x512xf32>
    %c510_i32_14 = arith.constant 510 : i32
    %61 = tpu.dynamic_rotate %55 by %c510_i32_14 dim 1 : vector<8x512xf32>, i32 -> vector<8x512xf32>
    %62 = vector.extract_strided_slice %11 {offsets = [0, 0], sizes = [1, 512], strides = [1, 1]} : vector<8x512xf32> to vector<1x512xf32>
    %63 = vector.broadcast %62 : vector<1x512xf32> to vector<8x512xf32>
    %64 = arith.addf %61, %63 : vector<8x512xf32>
    %65 = arith.maximumf %55, %64 : vector<8x512xf32>
    %c511_i32_15 = arith.constant 511 : i32
    %66 = tpu.dynamic_rotate %55 by %c511_i32_15 dim 1 : vector<8x512xf32>, i32 -> vector<8x512xf32>
    %67 = vector.extract_strided_slice %11 {offsets = [1, 0], sizes = [1, 512], strides = [1, 1]} : vector<8x512xf32> to vector<1x512xf32>
    %68 = vector.broadcast %67 : vector<1x512xf32> to vector<8x512xf32>
    %69 = arith.addf %66, %68 : vector<8x512xf32>
    %70 = arith.maximumf %65, %69 : vector<8x512xf32>
    %c1_i32_16 = arith.constant 1 : i32
    %71 = tpu.dynamic_rotate %55 by %c1_i32_16 dim 1 : vector<8x512xf32>, i32 -> vector<8x512xf32>
    %72 = vector.extract_strided_slice %11 {offsets = [2, 0], sizes = [1, 512], strides = [1, 1]} : vector<8x512xf32> to vector<1x512xf32>
    %73 = vector.broadcast %72 : vector<1x512xf32> to vector<8x512xf32>
    %74 = arith.addf %71, %73 : vector<8x512xf32>
    %75 = arith.maximumf %70, %74 : vector<8x512xf32>
    %c2_i32_17 = arith.constant 2 : i32
    %76 = tpu.dynamic_rotate %55 by %c2_i32_17 dim 1 : vector<8x512xf32>, i32 -> vector<8x512xf32>
    %77 = vector.extract_strided_slice %11 {offsets = [3, 0], sizes = [1, 512], strides = [1, 1]} : vector<8x512xf32> to vector<1x512xf32>
    %78 = vector.broadcast %77 : vector<1x512xf32> to vector<8x512xf32>
    %79 = arith.addf %76, %78 : vector<8x512xf32>
    %80 = arith.maximumf %75, %79 : vector<8x512xf32>
    %c480_i32_18 = arith.constant 480 : i32
    %81 = tpu.dynamic_rotate %80 by %c480_i32_18 dim 1 : vector<8x512xf32>, i32 -> vector<8x512xf32>
    %82 = vector.extract_strided_slice %11 {offsets = [4, 0], sizes = [1, 512], strides = [1, 1]} : vector<8x512xf32> to vector<1x512xf32>
    %83 = vector.broadcast %82 : vector<1x512xf32> to vector<8x512xf32>
    %84 = arith.addf %81, %83 : vector<8x512xf32>
    %85 = arith.maximumf %80, %84 : vector<8x512xf32>
    %c496_i32_19 = arith.constant 496 : i32
    %86 = tpu.dynamic_rotate %80 by %c496_i32_19 dim 1 : vector<8x512xf32>, i32 -> vector<8x512xf32>
    %87 = vector.extract_strided_slice %11 {offsets = [5, 0], sizes = [1, 512], strides = [1, 1]} : vector<8x512xf32> to vector<1x512xf32>
    %88 = vector.broadcast %87 : vector<1x512xf32> to vector<8x512xf32>
    %89 = arith.addf %86, %88 : vector<8x512xf32>
    %90 = arith.maximumf %85, %89 : vector<8x512xf32>
    %c16_i32_20 = arith.constant 16 : i32
    %91 = tpu.dynamic_rotate %80 by %c16_i32_20 dim 1 : vector<8x512xf32>, i32 -> vector<8x512xf32>
    %92 = vector.extract_strided_slice %11 {offsets = [6, 0], sizes = [1, 512], strides = [1, 1]} : vector<8x512xf32> to vector<1x512xf32>
    %93 = vector.broadcast %92 : vector<1x512xf32> to vector<8x512xf32>
    %94 = arith.addf %91, %93 : vector<8x512xf32>
    %95 = arith.maximumf %90, %94 : vector<8x512xf32>
    %c32_i32_21 = arith.constant 32 : i32
    %96 = tpu.dynamic_rotate %80 by %c32_i32_21 dim 1 : vector<8x512xf32>, i32 -> vector<8x512xf32>
    %97 = vector.extract_strided_slice %11 {offsets = [7, 0], sizes = [1, 512], strides = [1, 1]} : vector<8x512xf32> to vector<1x512xf32>
    %98 = vector.broadcast %97 : vector<1x512xf32> to vector<8x512xf32>
    %99 = arith.addf %96, %98 : vector<8x512xf32>
    %100 = arith.maximumf %95, %99 : vector<8x512xf32>
    %c2 = arith.constant 2 : index
    %c0_22 = arith.constant 0 : index
    %c0_23 = arith.constant 0 : index
    %101 = vector.load %arg2[%c2, %c0_22, %c0_23] : memref<4x32x8xbf16, #tpu.memory_space<vmem>>, vector<1x32x8xbf16>
    %102 = vector.shape_cast %101 : vector<1x32x8xbf16> to vector<32x8xbf16>
    %103 = arith.truncf %100 : vector<8x512xf32> to vector<8x512xbf16>
    %cst_24 = arith.constant dense<0.000000e+00> : vector<32x512xf32>
    %104 = tpu.matmul %102, %103, %cst_24 {dimension_numbers = #tpu.dot_dimension_numbers<[1], [0], [0], [1], [0, 0, 1, 1], [], []>} : vector<32x8xbf16>, vector<8x512xbf16>, vector<32x512xf32> -> vector<32x512xf32>
    %105 = arith.addf %60, %104 : vector<32x512xf32>
    %c510_i32_25 = arith.constant 510 : i32
    %106 = tpu.dynamic_rotate %100 by %c510_i32_25 dim 1 : vector<8x512xf32>, i32 -> vector<8x512xf32>
    %107 = vector.extract_strided_slice %11 {offsets = [0, 0], sizes = [1, 512], strides = [1, 1]} : vector<8x512xf32> to vector<1x512xf32>
    %108 = vector.broadcast %107 : vector<1x512xf32> to vector<8x512xf32>
    %109 = arith.addf %106, %108 : vector<8x512xf32>
    %110 = arith.maximumf %100, %109 : vector<8x512xf32>
    %c511_i32_26 = arith.constant 511 : i32
    %111 = tpu.dynamic_rotate %100 by %c511_i32_26 dim 1 : vector<8x512xf32>, i32 -> vector<8x512xf32>
    %112 = vector.extract_strided_slice %11 {offsets = [1, 0], sizes = [1, 512], strides = [1, 1]} : vector<8x512xf32> to vector<1x512xf32>
    %113 = vector.broadcast %112 : vector<1x512xf32> to vector<8x512xf32>
    %114 = arith.addf %111, %113 : vector<8x512xf32>
    %115 = arith.maximumf %110, %114 : vector<8x512xf32>
    %c1_i32_27 = arith.constant 1 : i32
    %116 = tpu.dynamic_rotate %100 by %c1_i32_27 dim 1 : vector<8x512xf32>, i32 -> vector<8x512xf32>
    %117 = vector.extract_strided_slice %11 {offsets = [2, 0], sizes = [1, 512], strides = [1, 1]} : vector<8x512xf32> to vector<1x512xf32>
    %118 = vector.broadcast %117 : vector<1x512xf32> to vector<8x512xf32>
    %119 = arith.addf %116, %118 : vector<8x512xf32>
    %120 = arith.maximumf %115, %119 : vector<8x512xf32>
    %c2_i32_28 = arith.constant 2 : i32
    %121 = tpu.dynamic_rotate %100 by %c2_i32_28 dim 1 : vector<8x512xf32>, i32 -> vector<8x512xf32>
    %122 = vector.extract_strided_slice %11 {offsets = [3, 0], sizes = [1, 512], strides = [1, 1]} : vector<8x512xf32> to vector<1x512xf32>
    %123 = vector.broadcast %122 : vector<1x512xf32> to vector<8x512xf32>
    %124 = arith.addf %121, %123 : vector<8x512xf32>
    %125 = arith.maximumf %120, %124 : vector<8x512xf32>
    %c480_i32_29 = arith.constant 480 : i32
    %126 = tpu.dynamic_rotate %125 by %c480_i32_29 dim 1 : vector<8x512xf32>, i32 -> vector<8x512xf32>
    %127 = vector.extract_strided_slice %11 {offsets = [4, 0], sizes = [1, 512], strides = [1, 1]} : vector<8x512xf32> to vector<1x512xf32>
    %128 = vector.broadcast %127 : vector<1x512xf32> to vector<8x512xf32>
    %129 = arith.addf %126, %128 : vector<8x512xf32>
    %130 = arith.maximumf %125, %129 : vector<8x512xf32>
    %c496_i32_30 = arith.constant 496 : i32
    %131 = tpu.dynamic_rotate %125 by %c496_i32_30 dim 1 : vector<8x512xf32>, i32 -> vector<8x512xf32>
    %132 = vector.extract_strided_slice %11 {offsets = [5, 0], sizes = [1, 512], strides = [1, 1]} : vector<8x512xf32> to vector<1x512xf32>
    %133 = vector.broadcast %132 : vector<1x512xf32> to vector<8x512xf32>
    %134 = arith.addf %131, %133 : vector<8x512xf32>
    %135 = arith.maximumf %130, %134 : vector<8x512xf32>
    %c16_i32_31 = arith.constant 16 : i32
    %136 = tpu.dynamic_rotate %125 by %c16_i32_31 dim 1 : vector<8x512xf32>, i32 -> vector<8x512xf32>
    %137 = vector.extract_strided_slice %11 {offsets = [6, 0], sizes = [1, 512], strides = [1, 1]} : vector<8x512xf32> to vector<1x512xf32>
    %138 = vector.broadcast %137 : vector<1x512xf32> to vector<8x512xf32>
    %139 = arith.addf %136, %138 : vector<8x512xf32>
    %140 = arith.maximumf %135, %139 : vector<8x512xf32>
    %c32_i32_32 = arith.constant 32 : i32
    %141 = tpu.dynamic_rotate %125 by %c32_i32_32 dim 1 : vector<8x512xf32>, i32 -> vector<8x512xf32>
    %142 = vector.extract_strided_slice %11 {offsets = [7, 0], sizes = [1, 512], strides = [1, 1]} : vector<8x512xf32> to vector<1x512xf32>
    %143 = vector.broadcast %142 : vector<1x512xf32> to vector<8x512xf32>
    %144 = arith.addf %141, %143 : vector<8x512xf32>
    %145 = arith.maximumf %140, %144 : vector<8x512xf32>
    %c3 = arith.constant 3 : index
    %c0_33 = arith.constant 0 : index
    %c0_34 = arith.constant 0 : index
    %146 = vector.load %arg2[%c3, %c0_33, %c0_34] : memref<4x32x8xbf16, #tpu.memory_space<vmem>>, vector<1x32x8xbf16>
    %147 = vector.shape_cast %146 : vector<1x32x8xbf16> to vector<32x8xbf16>
    %148 = arith.truncf %145 : vector<8x512xf32> to vector<8x512xbf16>
    %cst_35 = arith.constant dense<0.000000e+00> : vector<32x512xf32>
    %149 = tpu.matmul %147, %148, %cst_35 {dimension_numbers = #tpu.dot_dimension_numbers<[1], [0], [0], [1], [0, 0, 1, 1], [], []>} : vector<32x8xbf16>, vector<8x512xbf16>, vector<32x512xf32> -> vector<32x512xf32>
    %150 = arith.addf %105, %149 : vector<32x512xf32>
    %cst_36 = arith.constant 0.000000e+00 : f32
    %151 = vector.broadcast %cst_36 : f32 to vector<32x512xf32>
    %152 = arith.subf %151, %150 : vector<32x512xf32>
    %153 = math.exp %152 : vector<32x512xf32>
    %cst_37 = arith.constant 1.000000e+00 : f32
    %154 = vector.broadcast %cst_37 : f32 to vector<32x512xf32>
    %155 = arith.addf %154, %153 : vector<32x512xf32>
    %156 = tpu.reciprocal %155 {approx = true} : vector<32x512xf32> -> vector<32x512xf32>
    %157 = arith.mulf %150, %156 : vector<32x512xf32>
    %c0_38 = arith.constant 0 : index
    %c0_39 = arith.constant 0 : index
    %158 = vector.load %arg4[%c0_38, %c0_39] : memref<32x512xf32, #tpu.memory_space<vmem>>, vector<32x512xf32>
    tpu.vector_store %arg4[%c0_38, %c0_39], %157 {strides = array<i32>} : memref<32x512xf32, #tpu.memory_space<vmem>>, vector<32x512xf32>,
    return
  }
}

</mosaic_0001>

<llo_original>
// kernel: sppf_forward.1
$region0: #{sppf_forward.1}
  #allocation0 [shape = 'u32[]', space=smem, size = 0x4, offset = 0x4, fixed_abs, tag = 'smem constant byte address 0x4 - core index']
  #allocation1 [shape = 'u32[144,128]{1,0:T(1,128)}', space=vmem, size = 0x12000, scoped, tag = 'internal scratch']
  %s0 = inlined_call_operand.vmem [shape: f32[16,512], index: 0, kind: input, shape index: {}]
  %s1 = inlined_call_operand.vmem [shape: bf16[8,16], index: 1, kind: input, shape index: {}]
  %s2 = inlined_call_operand.vmem [shape: bf16[4,32,8], index: 2, kind: input, shape index: {}]
  %s3 = inlined_call_operand.vmem [shape: f32[8,512], index: 3, kind: input, shape index: {}]
  %s4 = inlined_call_operand.vmem [shape: f32[32,512], index: 4, kind: output, shape index: {}]
  %s5 = sld [smem:[#allocation0]]
  $region26: #{sppf_forward.1} parent=0
    _
  %s7 = ssub.s32 1, %s5
  %s8 = scalar_select 0, %s7, %s5
  // Predicated region
  $region2: #{sppf_forward.1} parent=0 // pred_check
    _
  $region3: #{sppf_forward.1} parent=0 // pred_check_branch
    %10 = sbr.rel (0) target = $region5
  $region4: #{sppf_forward.1} parent=0 // pred_region
    _
  $region5: #{sppf_forward.1} parent=0 // pred_fallthru
    _
  // Predicated region
  $region6: #{sppf_forward.1} parent=0 // pred_check
    _
  $region7: #{sppf_forward.1} parent=0 // pred_check_branch
    %12 = sbr.rel (0) target = $region9
  $region8: #{sppf_forward.1} parent=0 // pred_region
    _
  $region9: #{sppf_forward.1} parent=0 // pred_fallthru
    _
  // Predicated region
  $region10: #{sppf_forward.1} parent=0 // pred_check
    _
  $region11: #{sppf_forward.1} parent=0 // pred_check_branch
    %14 = sbr.rel (0) target = $region13
  $region12: #{sppf_forward.1} parent=0 // pred_region
    _
  $region13: #{sppf_forward.1} parent=0 // pred_fallthru
    _
  // Predicated region
  $region14: #{sppf_forward.1} parent=0 // pred_check
    _
  $region15: #{sppf_forward.1} parent=0 // pred_check_branch
    %16 = sbr.rel (0) target = $region17
  $region16: #{sppf_forward.1} parent=0 // pred_region
    _
  $region17: #{sppf_forward.1} parent=0 // pred_fallthru
    _
  %v18 = vld [vmem:[%s1] sm:$0xf]
  %v19 = vld [vmem:[%s0] sm:$0xff]
  %v20 = vld [vmem:[%s0 + $0x8] sm:$0xff]
  %v21 = vld [vmem:[%s0 + $0x10] sm:$0xff]
  %v22 = vld [vmem:[%s0 + $0x18] sm:$0xff]
  %v23 = vld [vmem:[%s0 + $0x20] sm:$0xff]
  %v24 = vld [vmem:[%s0 + $0x28] sm:$0xff]
  %v25 = vld [vmem:[%s0 + $0x30] sm:$0xff]
  %v26 = vld [vmem:[%s0 + $0x38] sm:$0xff]
  %v27 = vpack.c.bf16 %v23, %v19
  %v28 = vpack.c.bf16 %v24, %v20
  %v29 = vpack.c.bf16 %v25, %v21
  %v30 = vpack.c.bf16 %v26, %v22
  %vm31 = vcmask 130048
  %v33 = vsel %vm31, %v18, 0
  %35 = vmatprep.subr.bf16.mxu0 %v28
  %36 = vmatpush1.bf16.msra.mxu0 %v27
  %37 = vmatprep.subr.bf16.mxu0 0
  %38 = vmatpush1.bf16.msra.mxu0 0
  %39 = vmatprep.subr.bf16.mxu0 0
  %40 = vmatpush1.bf16.msra.mxu0 0
  %41 = vmatprep.subr.bf16.mxu0 0
  %42 = vmatpush1.bf16.msra.mxu0 0
  %43 = vmatprep.subr.bf16.mxu0 0
  %44 = vmatpush1.bf16.msra.mxu0 0
  %45 = vmatprep.subr.bf16.mxu0 0
  %46 = vmatpush1.bf16.msra.mxu0 0
  %47 = vmatprep.subr.bf16.mxu0 0
  %48 = vmatpush1.bf16.msra.mxu0 0
  %49 = vmatprep.subr.bf16.mxu0 0
  %50 = vmatpush1.bf16.msra.mxu0 0
  %51 = vmatprep.subr.bf16.mxu0 0
  %52 = vmatpush1.bf16.msra.mxu0 0
  %53 = vmatprep.subr.bf16.mxu0 0
  %54 = vmatpush1.bf16.msra.mxu0 0
  %55 = vmatprep.subr.bf16.mxu0 0
  %56 = vmatpush1.bf16.msra.mxu0 0
  %57 = vmatprep.subr.bf16.mxu0 0
  %58 = vmatpush1.bf16.msra.mxu0 0
  %59 = vmatprep.subr.bf16.mxu0 0
  %60 = vmatpush1.bf16.msra.mxu0 0
  %61 = vmatprep.subr.bf16.mxu0 0
  %62 = vmatpush1.bf16.msra.mxu0 0
  %63 = vmatprep.subr.bf16.mxu0 0
  %64 = vmatpush1.bf16.msra.mxu0 0
  %65 = vmatprep.subr.bf16.mxu0 0
  %66 = vmatpush1.bf16.msra.mxu0 0
  %67 = vmatprep.mubr.bf16.mxu0 0
  %68 = vmatmul.mubr.bf16.gmra.mrb[0].mxu0 %v33
  %v69 = vpop.f32.mrb[0].mxu0
  %v70 = vadd.f32 0.0, %v69
  %v71 = vpop.f32.mrb[0].mxu0
  %v72 = vadd.f32 0.0, %v71
  %v73 = vpop.f32.mrb[0].mxu0
  %v74 = vpop.f32.mrb[0].mxu0
  %75 = vdwg.mxu0
  %76 = vmatprep.subr.bf16.mxu0 %v30
  %77 = vmatpush1.bf16.msra.mxu0 %v29
  %78 = vmatprep.subr.bf16.mxu0 0
  %79 = vmatpush1.bf16.msra.mxu0 0
  %80 = vmatprep.subr.bf16.mxu0 0
  %81 = vmatpush1.bf16.msra.mxu0 0
  %82 = vmatprep.subr.bf16.mxu0 0
  %83 = vmatpush1.bf16.msra.mxu0 0
  %84 = vmatprep.subr.bf16.mxu0 0
  %85 = vmatpush1.bf16.msra.mxu0 0
  %86 = vmatprep.subr.bf16.mxu0 0
  %87 = vmatpush1.bf16.msra.mxu0 0
  %88 = vmatprep.subr.bf16.mxu0 0
  %89 = vmatpush1.bf16.msra.mxu0 0
  %90 = vmatprep.subr.bf16.mxu0 0
  %91 = vmatpush1.bf16.msra.mxu0 0
  %92 = vmatprep.subr.bf16.mxu0 0
  %93 = vmatpush1.bf16.msra.mxu0 0
  %94 = vmatprep.subr.bf16.mxu0 0
  %95 = vmatpush1.bf16.msra.mxu0 0
  %96 = vmatprep.subr.bf16.mxu0 0
  %97 = vmatpush1.bf16.msra.mxu0 0
  %98 = vmatprep.subr.bf16.mxu0 0
  %99 = vmatpush1.bf16.msra.mxu0 0
  %100 = vmatprep.subr.bf16.mxu0 0
  %101 = vmatpush1.bf16.msra.mxu0 0
  %102 = vmatprep.subr.bf16.mxu0 0
  %103 = vmatpush1.bf16.msra.mxu0 0
  %104 = vmatprep.subr.bf16.mxu0 0
  %105 = vmatpush1.bf16.msra.mxu0 0
  %106 = vmatprep.subr.bf16.mxu0 0
  %107 = vmatpush1.bf16.msra.mxu0 0
  %108 = vmatprep.mubr.bf16.mxu0 0
  %109 = vmatmul.mubr.bf16.gmra.mrb[0].mxu0 %v33
  %v110 = vpop.f32.mrb[0].mxu0
  %v111 = vadd.f32 0.0, %v110
  %v112 = vpop.f32.mrb[0].mxu0
  %v113 = vadd.f32 0.0, %v112
  %v114 = vpop.f32.mrb[0].mxu0
  %v115 = vpop.f32.mrb[0].mxu0
  %116 = vdwg.mxu0
  %v117 = vsub.f32 0.0, %v70
  %v118 = vsub.f32 0.0, %v72
  %v119 = vsub.f32 0.0, %v111
  %v120 = vsub.f32 0.0, %v113
  %v121 = vmul.f32 %v117, 1.442695
  %v122 = vpow.pop %v121
  %v123 = vmul.f32 %v118, 1.442695
  %v124 = vpow.pop %v123
  %v125 = vmul.f32 %v119, 1.442695
  %v126 = vpow.pop %v125
  %v127 = vmul.f32 %v120, 1.442695
  %v128 = vpow.pop %v127
  %v129 = vadd.f32 %v122, 1.0
  %v130 = vadd.f32 %v124, 1.0
  %v131 = vadd.f32 %v126, 1.0
  %v132 = vadd.f32 %v128, 1.0
  %v133 = vrcp.pop %v129
  %v134 = vrcp.pop %v130
  %v135 = vrcp.pop %v131
  %v136 = vrcp.pop %v132
  %v137 = vmul.f32 %v70, %v133
  %v138 = vmul.f32 %v72, %v134
  %v139 = vmul.f32 %v111, %v135
  %v140 = vmul.f32 %v113, %v136
  %v141 = vld [vmem:[%s3] sm:$0xff]
  %v142 = vld [vmem:[%s3 + $0x8] sm:$0xff]
  %v143 = vld [vmem:[%s3 + $0x10] sm:$0xff]
  %v144 = vld [vmem:[%s3 + $0x18] sm:$0xff]
  %v145 = vld [vmem:[%s2] sm:$0xf]
  %v146 = vld [vmem:[%s2 + $0x4] sm:$0xf]
  %v147 = vld [vmem:[%s2 + $0x8] sm:$0xf]
  %v148 = vld [vmem:[%s2 + $0xc] sm:$0xf]
  %v149 = vpack.c.bf16 %v137, %v137
  %v150 = vpack.c.bf16 %v138, %v138
  %v151 = vpack.c.bf16 %v139, %v139
  %v152 = vpack.c.bf16 %v140, %v140
  %153 = vrot.lane.b32.xlu0 %v137, 126
  %v154 = vpop.permute.xlu0 %153
  %155 = vrot.lane.b32.xlu0 %v138, 126
  %v156 = vpop.permute.xlu0 %155
  %157 = vrot.lane.b32.xlu0 %v139, 126
  %v158 = vpop.permute.xlu0 %157
  %159 = vrot.lane.b32.xlu0 %v140, 126
  %v160 = vpop.permute.xlu0 %159
  %v161 = vlaneseq
  %v162 = vand.u32 %v161, 127
  %vm163 = vcmp.lt.s32.totalorder %v162, 126
  %v164 = vsel %vm163, %v158, %v160
  %v165 = vsel %vm163, %v156, %v158
  %v166 = vsel %vm163, %v154, %v156
  %v167 = vsel %vm163, %v160, %v154
  %v168 = vlaneseq
  %v169 = vshrl.u32 %v168, 7
  %v170 = vsub.s32 0, %v169
  %v171 = vrot.slane %v141, %v170
  %v172 = vlaneseq
  %v173 = vshrl.u32 %v172, 7
  %v174 = vsub.s32 0, %v173
  %v175 = vrot.slane %v142, %v174
  %v176 = vlaneseq
  %v177 = vshrl.u32 %v176, 7
  %v178 = vsub.s32 0, %v177
  %v179 = vrot.slane %v143, %v178
  %v180 = vlaneseq
  %v181 = vshrl.u32 %v180, 7
  %v182 = vsub.s32 0, %v181
  %v183 = vrot.slane %v144, %v182
  %v184 = vadd.f32 %v166, %v171
  %v185 = vadd.f32 %v165, %v175
  %v186 = vadd.f32 %v164, %v179
  %v187 = vadd.f32 %v167, %v183
  %v188 = vmax.f32 %v137, %v184
  %v189 = vmax.f32 %v138, %v185
  %v190 = vmax.f32 %v139, %v186
  %v191 = vmax.f32 %v140, %v187
  %192 = vrot.lane.b32.xlu0 %v137, 127
  %v193 = vpop.permute.xlu0 %192
  %194 = vrot.lane.b32.xlu0 %v138, 127
  %v195 = vpop.permute.xlu0 %194
  %196 = vrot.lane.b32.xlu0 %v139, 127
  %v197 = vpop.permute.xlu0 %196
  %198 = vrot.lane.b32.xlu0 %v140, 127
  %v199 = vpop.permute.xlu0 %198
  %vm200 = vcmp.lt.s32.totalorder %v162, 127
  %v201 = vsel %vm200, %v197, %v199
  %v202 = vsel %vm200, %v195, %v197
  %v203 = vsel %vm200, %v193, %v195
  %v204 = vsel %vm200, %v199, %v193
  %v205 = vlaneseq
  %v206 = vshrl.u32 %v205, 7
  %v207 = vsub.s32 1, %v206
  %v208 = vrot.slane %v141, %v207
  %v209 = vlaneseq
  %v210 = vshrl.u32 %v209, 7
  %v211 = vsub.s32 1, %v210
  %v212 = vrot.slane %v142, %v211
  %v213 = vlaneseq
  %v214 = vshrl.u32 %v213, 7
  %v215 = vsub.s32 1, %v214
  %v216 = vrot.slane %v143, %v215
  %v217 = vlaneseq
  %v218 = vshrl.u32 %v217, 7
  %v219 = vsub.s32 1, %v218
  %v220 = vrot.slane %v144, %v219
  %v221 = vadd.f32 %v203, %v208
  %v222 = vadd.f32 %v202, %v212
  %v223 = vadd.f32 %v201, %v216
  %v224 = vadd.f32 %v204, %v220
  %v225 = vmax.f32 %v188, %v221
  %v226 = vmax.f32 %v189, %v222
  %v227 = vmax.f32 %v190, %v223
  %v228 = vmax.f32 %v191, %v224
  %229 = vrot.lane.b32.xlu0 %v137, 1
  %v230 = vpop.permute.xlu0 %229
  %231 = vrot.lane.b32.xlu0 %v138, 1
  %v232 = vpop.permute.xlu0 %231
  %233 = vrot.lane.b32.xlu0 %v139, 1
  %v234 = vpop.permute.xlu0 %233
  %235 = vrot.lane.b32.xlu0 %v140, 1
  %v236 = vpop.permute.xlu0 %235
  %vm237 = vcmp.lt.s32.totalorder %v162, 1
  %v238 = vsel %vm237, %v234, %v236
  %v239 = vsel %vm237, %v232, %v234
  %v240 = vsel %vm237, %v230, %v232
  %v241 = vsel %vm237, %v236, %v230
  %v242 = vlaneseq
  %v243 = vshrl.u32 %v242, 7
  %v244 = vsub.s32 2, %v243
  %v245 = vrot.slane %v141, %v244
  %v246 = vlaneseq
  %v247 = vshrl.u32 %v246, 7
  %v248 = vsub.s32 2, %v247
  %v249 = vrot.slane %v142, %v248
  %v250 = vlaneseq
  %v251 = vshrl.u32 %v250, 7
  %v252 = vsub.s32 2, %v251
  %v253 = vrot.slane %v143, %v252
  %v254 = vlaneseq
  %v255 = vshrl.u32 %v254, 7
  %v256 = vsub.s32 2, %v255
  %v257 = vrot.slane %v144, %v256
  %v258 = vadd.f32 %v241, %v245
  %v259 = vadd.f32 %v240, %v249
  %v260 = vadd.f32 %v239, %v253
  %v261 = vadd.f32 %v238, %v257
  %v262 = vmax.f32 %v225, %v258
  %v263 = vmax.f32 %v226, %v259
  %v264 = vmax.f32 %v227, %v260
  %v265 = vmax.f32 %v228, %v261
  %266 = vrot.lane.b32.xlu0 %v137, 2
  %v267 = vpop.permute.xlu0 %266
  %268 = vrot.lane.b32.xlu0 %v138, 2
  %v269 = vpop.permute.xlu0 %268
  %270 = vrot.lane.b32.xlu0 %v139, 2
  %v271 = vpop.permute.xlu0 %270
  %272 = vrot.lane.b32.xlu0 %v140, 2
  %v273 = vpop.permute.xlu0 %272
  %vm274 = vcmp.lt.s32.totalorder %v162, 2
  %v275 = vsel %vm274, %v271, %v273
  %v276 = vsel %vm274, %v269, %v271
  %v277 = vsel %vm274, %v267, %v269
  %v278 = vsel %vm274, %v273, %v267
  %v279 = vlaneseq
  %v280 = vshrl.u32 %v279, 7
  %v281 = vsub.s32 3, %v280
  %v282 = vrot.slane %v141, %v281
  %v283 = vlaneseq
  %v284 = vshrl.u32 %v283, 7
  %v285 = vsub.s32 3, %v284
  %v286 = vrot.slane %v142, %v285
  %v287 = vlaneseq
  %v288 = vshrl.u32 %v287, 7
  %v289 = vsub.s32 3, %v288
  %v290 = vrot.slane %v143, %v289
  %v291 = vlaneseq
  %v292 = vshrl.u32 %v291, 7
  %v293 = vsub.s32 3, %v292
  %v294 = vrot.slane %v144, %v293
  %v295 = vadd.f32 %v278, %v282
  %v296 = vadd.f32 %v277, %v286
  %v297 = vadd.f32 %v276, %v290
  %v298 = vadd.f32 %v275, %v294
  %v299 = vmax.f32 %v262, %v295
  %v300 = vmax.f32 %v263, %v296
  %v301 = vmax.f32 %v264, %v297
  %v302 = vmax.f32 %v265, %v298
  %303 = vrot.lane.b32.xlu0 %v299, 96
  %v304 = vpop.permute.xlu0 %303
  %305 = vrot.lane.b32.xlu0 %v300, 96
  %v306 = vpop.permute.xlu0 %305
  %307 = vrot.lane.b32.xlu0 %v301, 96
  %v308 = vpop.permute.xlu0 %307
  %309 = vrot.lane.b32.xlu0 %v302, 96
  %v310 = vpop.permute.xlu0 %309
  %vm311 = vcmp.lt.s32.totalorder %v162, 96
  %v312 = vsel %vm311, %v308, %v310
  %v313 = vsel %vm311, %v306, %v308
  %v314 = vsel %vm311, %v304, %v306
  %v315 = vsel %vm311, %v310, %v304
  %v316 = vlaneseq
  %v317 = vshrl.u32 %v316, 7
  %v318 = vsub.s32 4, %v317
  %v319 = vrot.slane %v141, %v318
  %v320 = vlaneseq
  %v321 = vshrl.u32 %v320, 7
  %v322 = vsub.s32 4, %v321
  %v323 = vrot.slane %v142, %v322
  %v324 = vlaneseq
  %v325 = vshrl.u32 %v324, 7
  %v326 = vsub.s32 4, %v325
  %v327 = vrot.slane %v143, %v326
  %v328 = vlaneseq
  %v329 = vshrl.u32 %v328, 7
  %v330 = vsub.s32 4, %v329
  %v331 = vrot.slane %v144, %v330
  %v332 = vadd.f32 %v314, %v319
  %v333 = vadd.f32 %v313, %v323
  %v334 = vadd.f32 %v312, %v327
  %v335 = vadd.f32 %v315, %v331
  %v336 = vmax.f32 %v299, %v332
  %v337 = vmax.f32 %v300, %v333
  %v338 = vmax.f32 %v301, %v334
  %v339 = vmax.f32 %v302, %v335
  %340 = vrot.lane.b32.xlu0 %v299, 112
  %v341 = vpop.permute.xlu0 %340
  %342 = vrot.lane.b32.xlu0 %v300, 112
  %v343 = vpop.permute.xlu0 %342
  %344 = vrot.lane.b32.xlu0 %v301, 112
  %v345 = vpop.permute.xlu0 %344
  %346 = vrot.lane.b32.xlu0 %v302, 112
  %v347 = vpop.permute.xlu0 %346
  %vm348 = vcmp.lt.s32.totalorder %v162, 112
  %v349 = vsel %vm348, %v345, %v347
  %v350 = vsel %vm348, %v343, %v345
  %v351 = vsel %vm348, %v341, %v343
  %v352 = vsel %vm348, %v347, %v341
  %v353 = vlaneseq
  %v354 = vshrl.u32 %v353, 7
  %v355 = vsub.s32 5, %v354
  %v356 = vrot.slane %v141, %v355
  %v357 = vlaneseq
  %v358 = vshrl.u32 %v357, 7
  %v359 = vsub.s32 5, %v358
  %v360 = vrot.slane %v142, %v359
  %v361 = vlaneseq
  %v362 = vshrl.u32 %v361, 7
  %v363 = vsub.s32 5, %v362
  %v364 = vrot.slane %v143, %v363
  %v365 = vlaneseq
  %v366 = vshrl.u32 %v365, 7
  %v367 = vsub.s32 5, %v366
  %v368 = vrot.slane %v144, %v367
  %v369 = vadd.f32 %v351, %v356
  %v370 = vadd.f32 %v350, %v360
  %v371 = vadd.f32 %v349, %v364
  %v372 = vadd.f32 %v352, %v368
  %v373 = vmax.f32 %v336, %v369
  %v374 = vmax.f32 %v337, %v370
  %v375 = vmax.f32 %v338, %v371
  %v376 = vmax.f32 %v339, %v372
  %377 = vrot.lane.b32.xlu0 %v299, 16
  %v378 = vpop.permute.xlu0 %377
  %379 = vrot.lane.b32.xlu0 %v300, 16
  %v380 = vpop.permute.xlu0 %379
  %381 = vrot.lane.b32.xlu0 %v301, 16
  %v382 = vpop.permute.xlu0 %381
  %383 = vrot.lane.b32.xlu0 %v302, 16
  %v384 = vpop.permute.xlu0 %383
  %vm385 = vcmp.lt.s32.totalorder %v162, 16
  %v386 = vsel %vm385, %v382, %v384
  %v387 = vsel %vm385, %v380, %v382
  %v388 = vsel %vm385, %v378, %v380
  %v389 = vsel %vm385, %v384, %v378
  %v390 = vlaneseq
  %v391 = vshrl.u32 %v390, 7
  %v392 = vsub.s32 6, %v391
  %v393 = vrot.slane %v141, %v392
  %v394 = vlaneseq
  %v395 = vshrl.u32 %v394, 7
  %v396 = vsub.s32 6, %v395
  %v397 = vrot.slane %v142, %v396
  %v398 = vlaneseq
  %v399 = vshrl.u32 %v398, 7
  %v400 = vsub.s32 6, %v399
  %v401 = vrot.slane %v143, %v400
  %v402 = vlaneseq
  %v403 = vshrl.u32 %v402, 7
  %v404 = vsub.s32 6, %v403
  %v405 = vrot.slane %v144, %v404
  %v406 = vadd.f32 %v389, %v393
  %v407 = vadd.f32 %v388, %v397
  %v408 = vadd.f32 %v387, %v401
  %v409 = vadd.f32 %v386, %v405
  %v410 = vmax.f32 %v373, %v406
  %v411 = vmax.f32 %v374, %v407
  %v412 = vmax.f32 %v375, %v408
  %v413 = vmax.f32 %v376, %v409
  %414 = vrot.lane.b32.xlu0 %v299, 32
  %v415 = vpop.permute.xlu0 %414
  %416 = vrot.lane.b32.xlu0 %v300, 32
  %v417 = vpop.permute.xlu0 %416
  %418 = vrot.lane.b32.xlu0 %v301, 32
  %v419 = vpop.permute.xlu0 %418
  %420 = vrot.lane.b32.xlu0 %v302, 32
  %v421 = vpop.permute.xlu0 %420
  %vm422 = vcmp.lt.s32.totalorder %v162, 32
  %v423 = vsel %vm422, %v419, %v421
  %v424 = vsel %vm422, %v417, %v419
  %v425 = vsel %vm422, %v415, %v417
  %v426 = vsel %vm422, %v421, %v415
  %v427 = vlaneseq
  %v428 = vshrl.u32 %v427, 7
  %v429 = vsub.s32 7, %v428
  %v430 = vrot.slane %v141, %v429
  %v431 = vlaneseq
  %v432 = vshrl.u32 %v431, 7
  %v433 = vsub.s32 7, %v432
  %v434 = vrot.slane %v142, %v433
  %v435 = vlaneseq
  %v436 = vshrl.u32 %v435, 7
  %v437 = vsub.s32 7, %v436
  %v438 = vrot.slane %v143, %v437
  %v439 = vlaneseq
  %v440 = vshrl.u32 %v439, 7
  %v441 = vsub.s32 7, %v440
  %v442 = vrot.slane %v144, %v441
  %v443 = vadd.f32 %v426, %v430
  %v444 = vadd.f32 %v425, %v434
  %v445 = vadd.f32 %v424, %v438
  %v446 = vadd.f32 %v423, %v442
  %v447 = vmax.f32 %v410, %v443
  %v448 = vmax.f32 %v411, %v444
  %v449 = vmax.f32 %v412, %v445
  %v450 = vmax.f32 %v413, %v446
  %s451 = scalar_lea.vmem %s2, 16
  %v452 = vld [vmem:[%s451] sm:$0xf]
  %v453 = vld [vmem:[%s451 + $0x4] sm:$0xf]
  %v454 = vld [vmem:[%s451 + $0x8] sm:$0xf]
  %v455 = vld [vmem:[%s451 + $0xc] sm:$0xf]
  %v456 = vpack.c.bf16 %v447, %v447
  %v457 = vpack.c.bf16 %v448, %v448
  %v458 = vpack.c.bf16 %v449, %v449
  %v459 = vpack.c.bf16 %v450, %v450
  %v464 = vunpack.c.l.b16 %v452
  %v465 = vunpack.c.l.b16 %v453
  %v466 = vunpack.c.l.b16 %v454
  %v467 = vunpack.c.l.b16 %v455
  %v468 = vpack.c.b16 %v465, %v464
  %v469 = vpack.c.b16 %v467, %v466
  %vm470 = vcmask 64512
  %v472 = vsel %vm470, %v468, 0
  %v475 = vsel %vm470, %v469, 0
  %vm477 = vcmask 1043456
  %v479 = vsel %vm477, %v456, 0
  %v482 = vsel %vm477, %v457, 0
  %v485 = vsel %vm477, %v458, 0
  %v488 = vsel %vm477, %v459, 0
  %490 = vmatprep.subr.bf16.mxu0 %v482
  %491 = vmatpush1.bf16.msra.mxu0 %v479
  %492 = vmatprep.subr.bf16.mxu0 0
  %493 = vmatpush1.bf16.msra.mxu0 0
  %494 = vmatprep.subr.bf16.mxu0 0
  %495 = vmatpush1.bf16.msra.mxu0 0
  %496 = vmatprep.subr.bf16.mxu0 0
  %497 = vmatpush1.bf16.msra.mxu0 0
  %498 = vmatprep.subr.bf16.mxu0 0
  %499 = vmatpush1.bf16.msra.mxu0 0
  %500 = vmatprep.subr.bf16.mxu0 0
  %501 = vmatpush1.bf16.msra.mxu0 0
  %502 = vmatprep.subr.bf16.mxu0 0
  %503 = vmatpush1.bf16.msra.mxu0 0
  %504 = vmatprep.subr.bf16.mxu0 0
  %505 = vmatpush1.bf16.msra.mxu0 0
  %506 = vmatprep.subr.bf16.mxu0 0
  %507 = vmatpush1.bf16.msra.mxu0 0
  %508 = vmatprep.subr.bf16.mxu0 0
  %509 = vmatpush1.bf16.msra.mxu0 0
  %510 = vmatprep.subr.bf16.mxu0 0
  %511 = vmatpush1.bf16.msra.mxu0 0
  %512 = vmatprep.subr.bf16.mxu0 0
  %513 = vmatpush1.bf16.msra.mxu0 0
  %514 = vmatprep.subr.bf16.mxu0 0
  %515 = vmatpush1.bf16.msra.mxu0 0
  %516 = vmatprep.subr.bf16.mxu0 0
  %517 = vmatpush1.bf16.msra.mxu0 0
  %518 = vmatprep.subr.bf16.mxu0 0
  %519 = vmatpush1.bf16.msra.mxu0 0
  %520 = vmatprep.subr.bf16.mxu0 0
  %521 = vmatpush1.bf16.msra.mxu0 0
  %522 = vmatprep.mubr.bf16.mxu0 0
  %523 = vmatmul.mubr.bf16.gmra.mrb[0].mxu0 %v472
  %v524 = vpop.f32.mrb[0].mxu0
  %v525 = vadd.f32 0.0, %v524
  %v526 = vpop.f32.mrb[0].mxu0
  %v527 = vadd.f32 0.0, %v526
  %v528 = vpop.f32.mrb[0].mxu0
  %v529 = vadd.f32 0.0, %v528
  %v530 = vpop.f32.mrb[0].mxu0
  %v531 = vadd.f32 0.0, %v530
  %532 = vmatprep.mubr.bf16.mxu0 0
  %533 = vmatmul.mubr.bf16.gmra.mrb[0].mxu0 %v475
  %v534 = vpop.f32.mrb[0].mxu0
  %v535 = vadd.f32 0.0, %v534
  %v536 = vpop.f32.mrb[0].mxu0
  %v537 = vadd.f32 0.0, %v536
  %v538 = vpop.f32.mrb[0].mxu0
  %v539 = vadd.f32 0.0, %v538
  %v540 = vpop.f32.mrb[0].mxu0
  %v541 = vadd.f32 0.0, %v540
  %542 = vdwg.mxu0
  %543 = vmatprep.subr.bf16.mxu0 %v488
  %544 = vmatpush1.bf16.msra.mxu0 %v485
  %545 = vmatprep.subr.bf16.mxu0 0
  %546 = vmatpush1.bf16.msra.mxu0 0
  %547 = vmatprep.subr.bf16.mxu0 0
  %548 = vmatpush1.bf16.msra.mxu0 0
  %549 = vmatprep.subr.bf16.mxu0 0
  %550 = vmatpush1.bf16.msra.mxu0 0
  %551 = vmatprep.subr.bf16.mxu0 0
  %552 = vmatpush1.bf16.msra.mxu0 0
  %553 = vmatprep.subr.bf16.mxu0 0
  %554 = vmatpush1.bf16.msra.mxu0 0
  %555 = vmatprep.subr.bf16.mxu0 0
  %556 = vmatpush1.bf16.msra.mxu0 0
  %557 = vmatprep.subr.bf16.mxu0 0
  %558 = vmatpush1.bf16.msra.mxu0 0
  %559 = vmatprep.subr.bf16.mxu0 0
  %560 = vmatpush1.bf16.msra.mxu0 0
  %561 = vmatprep.subr.bf16.mxu0 0
  %562 = vmatpush1.bf16.msra.mxu0 0
  %563 = vmatprep.subr.bf16.mxu0 0
  %564 = vmatpush1.bf16.msra.mxu0 0
  %565 = vmatprep.subr.bf16.mxu0 0
  %566 = vmatpush1.bf16.msra.mxu0 0
  %567 = vmatprep.subr.bf16.mxu0 0
  %568 = vmatpush1.bf16.msra.mxu0 0
  %569 = vmatprep.subr.bf16.mxu0 0
  %570 = vmatpush1.bf16.msra.mxu0 0
  %571 = vmatprep.subr.bf16.mxu0 0
  %572 = vmatpush1.bf16.msra.mxu0 0
  %573 = vmatprep.subr.bf16.mxu0 0
  %574 = vmatpush1.bf16.msra.mxu0 0
  %575 = vmatprep.mubr.bf16.mxu0 0
  %576 = vmatmul.mubr.bf16.gmra.mrb[0].mxu0 %v472
  %v577 = vpop.f32.mrb[0].mxu0
  %v578 = vadd.f32 0.0, %v577
  %v579 = vpop.f32.mrb[0].mxu0
  %v580 = vadd.f32 0.0, %v579
  %v581 = vpop.f32.mrb[0].mxu0
  %v582 = vadd.f32 0.0, %v581
  %v583 = vpop.f32.mrb[0].mxu0
  %v584 = vadd.f32 0.0, %v583
  %585 = vmatprep.mubr.bf16.mxu0 0
  %586 = vmatmul.mubr.bf16.gmra.mrb[0].mxu0 %v475
  %v587 = vpop.f32.mrb[0].mxu0
  %v588 = vadd.f32 0.0, %v587
  %v589 = vpop.f32.mrb[0].mxu0
  %v590 = vadd.f32 0.0, %v589
  %v591 = vpop.f32.mrb[0].mxu0
  %v592 = vadd.f32 0.0, %v591
  %v593 = vpop.f32.mrb[0].mxu0
  %v594 = vadd.f32 0.0, %v593
  %595 = vdwg.mxu0
  %v600 = vunpack.c.l.b16 %v145
  %v601 = vunpack.c.l.b16 %v146
  %v602 = vunpack.c.l.b16 %v147
  %v603 = vunpack.c.l.b16 %v148
  %v604 = vpack.c.b16 %v601, %v600
  %v605 = vpack.c.b16 %v603, %v602
  %v607 = vsel %vm470, %v604, 0
  %v610 = vsel %vm470, %v605, 0
  %v613 = vsel %vm477, %v149, 0
  %v616 = vsel %vm477, %v150, 0
  %v619 = vsel %vm477, %v151, 0
  %v622 = vsel %vm477, %v152, 0
  %624 = vmatprep.subr.bf16.mxu0 %v616
  %625 = vmatpush1.bf16.msra.mxu0 %v613
  %626 = vmatprep.subr.bf16.mxu0 0
  %627 = vmatpush1.bf16.msra.mxu0 0
  %628 = vmatprep.subr.bf16.mxu0 0
  %629 = vmatpush1.bf16.msra.mxu0 0
  %630 = vmatprep.subr.bf16.mxu0 0
  %631 = vmatpush1.bf16.msra.mxu0 0
  %632 = vmatprep.subr.bf16.mxu0 0
  %633 = vmatpush1.bf16.msra.mxu0 0
  %634 = vmatprep.subr.bf16.mxu0 0
  %635 = vmatpush1.bf16.msra.mxu0 0
  %636 = vmatprep.subr.bf16.mxu0 0
  %637 = vmatpush1.bf16.msra.mxu0 0
  %638 = vmatprep.subr.bf16.mxu0 0
  %639 = vmatpush1.bf16.msra.mxu0 0
  %640 = vmatprep.subr.bf16.mxu0 0
  %641 = vmatpush1.bf16.msra.mxu0 0
  %642 = vmatprep.subr.bf16.mxu0 0
  %643 = vmatpush1.bf16.msra.mxu0 0
  %644 = vmatprep.subr.bf16.mxu0 0
  %645 = vmatpush1.bf16.msra.mxu0 0
  %646 = vmatprep.subr.bf16.mxu0 0
  %647 = vmatpush1.bf16.msra.mxu0 0
  %648 = vmatprep.subr.bf16.mxu0 0
  %649 = vmatpush1.bf16.msra.mxu0 0
  %650 = vmatprep.subr.bf16.mxu0 0
  %651 = vmatpush1.bf16.msra.mxu0 0
  %652 = vmatprep.subr.bf16.mxu0 0
  %653 = vmatpush1.bf16.msra.mxu0 0
  %654 = vmatprep.subr.bf16.mxu0 0
  %655 = vmatpush1.bf16.msra.mxu0 0
  %656 = vmatprep.mubr.bf16.mxu0 0
  %657 = vmatmul.mubr.bf16.gmra.mrb[0].mxu0 %v607
  %v658 = vpop.f32.mrb[0].mxu0
  %v659 = vadd.f32 %v525, %v658
  %v660 = vpop.f32.mrb[0].mxu0
  %v661 = vadd.f32 %v527, %v660
  %v662 = vpop.f32.mrb[0].mxu0
  %v663 = vadd.f32 %v529, %v662
  %v664 = vpop.f32.mrb[0].mxu0
  %v665 = vadd.f32 %v531, %v664
  %666 = vmatprep.mubr.bf16.mxu0 0
  %667 = vmatmul.mubr.bf16.gmra.mrb[0].mxu0 %v610
  %v668 = vpop.f32.mrb[0].mxu0
  %v669 = vadd.f32 %v535, %v668
  %v670 = vpop.f32.mrb[0].mxu0
  %v671 = vadd.f32 %v537, %v670
  %v672 = vpop.f32.mrb[0].mxu0
  %v673 = vadd.f32 %v539, %v672
  %v674 = vpop.f32.mrb[0].mxu0
  %v675 = vadd.f32 %v541, %v674
  %676 = vdwg.mxu0
  %677 = vmatprep.subr.bf16.mxu0 %v622
  %678 = vmatpush1.bf16.msra.mxu0 %v619
  %679 = vmatprep.subr.bf16.mxu0 0
  %680 = vmatpush1.bf16.msra.mxu0 0
  %681 = vmatprep.subr.bf16.mxu0 0
  %682 = vmatpush1.bf16.msra.mxu0 0
  %683 = vmatprep.subr.bf16.mxu0 0
  %684 = vmatpush1.bf16.msra.mxu0 0
  %685 = vmatprep.subr.bf16.mxu0 0
  %686 = vmatpush1.bf16.msra.mxu0 0
  %687 = vmatprep.subr.bf16.mxu0 0
  %688 = vmatpush1.bf16.msra.mxu0 0
  %689 = vmatprep.subr.bf16.mxu0 0
  %690 = vmatpush1.bf16.msra.mxu0 0
  %691 = vmatprep.subr.bf16.mxu0 0
  %692 = vmatpush1.bf16.msra.mxu0 0
  %693 = vmatprep.subr.bf16.mxu0 0
  %694 = vmatpush1.bf16.msra.mxu0 0
  %695 = vmatprep.subr.bf16.mxu0 0
  %696 = vmatpush1.bf16.msra.mxu0 0
  %697 = vmatprep.subr.bf16.mxu0 0
  %698 = vmatpush1.bf16.msra.mxu0 0
  %699 = vmatprep.subr.bf16.mxu0 0
  %700 = vmatpush1.bf16.msra.mxu0 0
  %701 = vmatprep.subr.bf16.mxu0 0
  %702 = vmatpush1.bf16.msra.mxu0 0
  %703 = vmatprep.subr.bf16.mxu0 0
  %704 = vmatpush1.bf16.msra.mxu0 0
  %705 = vmatprep.subr.bf16.mxu0 0
  %706 = vmatpush1.bf16.msra.mxu0 0
  %707 = vmatprep.subr.bf16.mxu0 0
  %708 = vmatpush1.bf16.msra.mxu0 0
  %709 = vmatprep.mubr.bf16.mxu0 0
  %710 = vmatmul.mubr.bf16.gmra.mrb[0].mxu0 %v607
  %v711 = vpop.f32.mrb[0].mxu0
  %v712 = vadd.f32 %v578, %v711
  %v713 = vpop.f32.mrb[0].mxu0
  %v714 = vadd.f32 %v580, %v713
  %v715 = vpop.f32.mrb[0].mxu0
  %v716 = vadd.f32 %v582, %v715
  %v717 = vpop.f32.mrb[0].mxu0
  %v718 = vadd.f32 %v584, %v717
  %719 = vmatprep.mubr.bf16.mxu0 0
  %720 = vmatmul.mubr.bf16.gmra.mrb[0].mxu0 %v610
  %v721 = vpop.f32.mrb[0].mxu0
  %v722 = vadd.f32 %v588, %v721
  %v723 = vpop.f32.mrb[0].mxu0
  %v724 = vadd.f32 %v590, %v723
  %v725 = vpop.f32.mrb[0].mxu0
  %v726 = vadd.f32 %v592, %v725
  %v727 = vpop.f32.mrb[0].mxu0
  %v728 = vadd.f32 %v594, %v727
  %729 = vdwg.mxu0
  %730 = vrot.lane.b32.xlu0 %v447, 126
  %v731 = vpop.permute.xlu0 %730
  %732 = vrot.lane.b32.xlu0 %v448, 126
  %v733 = vpop.permute.xlu0 %732
  %734 = vrot.lane.b32.xlu0 %v449, 126
  %v735 = vpop.permute.xlu0 %734
  %736 = vrot.lane.b32.xlu0 %v450, 126
  %v737 = vpop.permute.xlu0 %736
  %v738 = vsel %vm163, %v735, %v737
  %v739 = vsel %vm163, %v733, %v735
  %v740 = vsel %vm163, %v731, %v733
  %v741 = vsel %vm163, %v737, %v731
  %v742 = vadd.f32 %v740, %v171
  %v743 = vadd.f32 %v739, %v175
  %v744 = vadd.f32 %v738, %v179
  %v745 = vadd.f32 %v741, %v183
  %v746 = vmax.f32 %v447, %v742
  %v747 = vmax.f32 %v448, %v743
  %v748 = vmax.f32 %v449, %v744
  %v749 = vmax.f32 %v450, %v745
  %750 = vrot.lane.b32.xlu0 %v447, 127
  %v751 = vpop.permute.xlu0 %750
  %752 = vrot.lane.b32.xlu0 %v448, 127
  %v753 = vpop.permute.xlu0 %752
  %754 = vrot.lane.b32.xlu0 %v449, 127
  %v755 = vpop.permute.xlu0 %754
  %756 = vrot.lane.b32.xlu0 %v450, 127
  %v757 = vpop.permute.xlu0 %756
  %v758 = vsel %vm200, %v755, %v757
  %v759 = vsel %vm200, %v753, %v755
  %v760 = vsel %vm200, %v751, %v753
  %v761 = vsel %vm200, %v757, %v751
  %v762 = vadd.f32 %v760, %v208
  %v763 = vadd.f32 %v759, %v212
  %v764 = vadd.f32 %v758, %v216
  %v765 = vadd.f32 %v761, %v220
  %v766 = vmax.f32 %v746, %v762
  %v767 = vmax.f32 %v747, %v763
  %v768 = vmax.f32 %v748, %v764
  %v769 = vmax.f32 %v749, %v765
  %770 = vrot.lane.b32.xlu0 %v447, 1
  %v771 = vpop.permute.xlu0 %770
  %772 = vrot.lane.b32.xlu0 %v448, 1
  %v773 = vpop.permute.xlu0 %772
  %774 = vrot.lane.b32.xlu0 %v449, 1
  %v775 = vpop.permute.xlu0 %774
  %776 = vrot.lane.b32.xlu0 %v450, 1
  %v777 = vpop.permute.xlu0 %776
  %v778 = vsel %vm237, %v775, %v777
  %v779 = vsel %vm237, %v773, %v775
  %v780 = vsel %vm237, %v771, %v773
  %v781 = vsel %vm237, %v777, %v771
  %v782 = vadd.f32 %v781, %v245
  %v783 = vadd.f32 %v780, %v249
  %v784 = vadd.f32 %v779, %v253
  %v785 = vadd.f32 %v778, %v257
  %v786 = vmax.f32 %v766, %v782
  %v787 = vmax.f32 %v767, %v783
  %v788 = vmax.f32 %v768, %v784
  %v789 = vmax.f32 %v769, %v785
  %790 = vrot.lane.b32.xlu0 %v447, 2
  %v791 = vpop.permute.xlu0 %790
  %792 = vrot.lane.b32.xlu0 %v448, 2
  %v793 = vpop.permute.xlu0 %792
  %794 = vrot.lane.b32.xlu0 %v449, 2
  %v795 = vpop.permute.xlu0 %794
  %796 = vrot.lane.b32.xlu0 %v450, 2
  %v797 = vpop.permute.xlu0 %796
  %v798 = vsel %vm274, %v795, %v797
  %v799 = vsel %vm274, %v793, %v795
  %v800 = vsel %vm274, %v791, %v793
  %v801 = vsel %vm274, %v797, %v791
  %v802 = vadd.f32 %v801, %v282
  %v803 = vadd.f32 %v800, %v286
  %v804 = vadd.f32 %v799, %v290
  %v805 = vadd.f32 %v798, %v294
  %v806 = vmax.f32 %v786, %v802
  %v807 = vmax.f32 %v787, %v803
  %v808 = vmax.f32 %v788, %v804
  %v809 = vmax.f32 %v789, %v805
  %810 = vrot.lane.b32.xlu0 %v806, 96
  %v811 = vpop.permute.xlu0 %810
  %812 = vrot.lane.b32.xlu0 %v807, 96
  %v813 = vpop.permute.xlu0 %812
  %814 = vrot.lane.b32.xlu0 %v808, 96
  %v815 = vpop.permute.xlu0 %814
  %816 = vrot.lane.b32.xlu0 %v809, 96
  %v817 = vpop.permute.xlu0 %816
  %v818 = vsel %vm311, %v815, %v817
  %v819 = vsel %vm311, %v813, %v815
  %v820 = vsel %vm311, %v811, %v813
  %v821 = vsel %vm311, %v817, %v811
  %v822 = vadd.f32 %v820, %v319
  %v823 = vadd.f32 %v819, %v323
  %v824 = vadd.f32 %v818, %v327
  %v825 = vadd.f32 %v821, %v331
  %v826 = vmax.f32 %v806, %v822
  %v827 = vmax.f32 %v807, %v823
  %v828 = vmax.f32 %v808, %v824
  %v829 = vmax.f32 %v809, %v825
  %830 = vrot.lane.b32.xlu0 %v806, 112
  %v831 = vpop.permute.xlu0 %830
  %832 = vrot.lane.b32.xlu0 %v807, 112
  %v833 = vpop.permute.xlu0 %832
  %834 = vrot.lane.b32.xlu0 %v808, 112
  %v835 = vpop.permute.xlu0 %834
  %836 = vrot.lane.b32.xlu0 %v809, 112
  %v837 = vpop.permute.xlu0 %836
  %v838 = vsel %vm348, %v835, %v837
  %v839 = vsel %vm348, %v833, %v835
  %v840 = vsel %vm348, %v831, %v833
  %v841 = vsel %vm348, %v837, %v831
  %v842 = vadd.f32 %v840, %v356
  %v843 = vadd.f32 %v839, %v360
  %v844 = vadd.f32 %v838, %v364
  %v845 = vadd.f32 %v841, %v368
  %v846 = vmax.f32 %v826, %v842
  %v847 = vmax.f32 %v827, %v843
  %v848 = vmax.f32 %v828, %v844
  %v849 = vmax.f32 %v829, %v845
  %850 = vrot.lane.b32.xlu0 %v806, 16
  %v851 = vpop.permute.xlu0 %850
  %852 = vrot.lane.b32.xlu0 %v807, 16
  %v853 = vpop.permute.xlu0 %852
  %854 = vrot.lane.b32.xlu0 %v808, 16
  %v855 = vpop.permute.xlu0 %854
  %856 = vrot.lane.b32.xlu0 %v809, 16
  %v857 = vpop.permute.xlu0 %856
  %v858 = vsel %vm385, %v855, %v857
  %v859 = vsel %vm385, %v853, %v855
  %v860 = vsel %vm385, %v851, %v853
  %v861 = vsel %vm385, %v857, %v851
  %v862 = vadd.f32 %v861, %v393
  %v863 = vadd.f32 %v860, %v397
  %v864 = vadd.f32 %v859, %v401
  %v865 = vadd.f32 %v858, %v405
  %v866 = vmax.f32 %v846, %v862
  %v867 = vmax.f32 %v847, %v863
  %v868 = vmax.f32 %v848, %v864
  %v869 = vmax.f32 %v849, %v865
  %870 = vrot.lane.b32.xlu0 %v806, 32
  %v871 = vpop.permute.xlu0 %870
  %872 = vrot.lane.b32.xlu0 %v807, 32
  %v873 = vpop.permute.xlu0 %872
  %874 = vrot.lane.b32.xlu0 %v808, 32
  %v875 = vpop.permute.xlu0 %874
  %876 = vrot.lane.b32.xlu0 %v809, 32
  %v877 = vpop.permute.xlu0 %876
  %v878 = vsel %vm422, %v875, %v877
  %v879 = vsel %vm422, %v873, %v875
  %v880 = vsel %vm422, %v871, %v873
  %v881 = vsel %vm422, %v877, %v871
  %v882 = vadd.f32 %v881, %v430
  %v883 = vadd.f32 %v880, %v434
  %v884 = vadd.f32 %v879, %v438
  %v885 = vadd.f32 %v878, %v442
  %v886 = vmax.f32 %v866, %v882
  %v887 = vmax.f32 %v867, %v883
  %v888 = vmax.f32 %v868, %v884
  %v889 = vmax.f32 %v869, %v885
  %s890 = scalar_lea.vmem %s2, 32
  %v891 = vld [vmem:[%s890] sm:$0xf]
  %v892 = vld [vmem:[%s890 + $0x4] sm:$0xf]
  %v893 = vld [vmem:[%s890 + $0x8] sm:$0xf]
  %v894 = vld [vmem:[%s890 + $0xc] sm:$0xf]
  %v895 = vpack.c.bf16 %v886, %v886
  %v896 = vpack.c.bf16 %v887, %v887
  %v897 = vpack.c.bf16 %v888, %v888
  %v898 = vpack.c.bf16 %v889, %v889
  %v903 = vunpack.c.l.b16 %v891
  %v904 = vunpack.c.l.b16 %v892
  %v905 = vunpack.c.l.b16 %v893
  %v906 = vunpack.c.l.b16 %v894
  %v907 = vpack.c.b16 %v904, %v903
  %v908 = vpack.c.b16 %v906, %v905
  %v910 = vsel %vm470, %v907, 0
  %v913 = vsel %vm470, %v908, 0
  %v916 = vsel %vm477, %v895, 0
  %v919 = vsel %vm477, %v896, 0
  %v922 = vsel %vm477, %v897, 0
  %v925 = vsel %vm477, %v898, 0
  %927 = vmatprep.subr.bf16.mxu0 %v919
  %928 = vmatpush1.bf16.msra.mxu0 %v916
  %929 = vmatprep.subr.bf16.mxu0 0
  %930 = vmatpush1.bf16.msra.mxu0 0
  %931 = vmatprep.subr.bf16.mxu0 0
  %932 = vmatpush1.bf16.msra.mxu0 0
  %933 = vmatprep.subr.bf16.mxu0 0
  %934 = vmatpush1.bf16.msra.mxu0 0
  %935 = vmatprep.subr.bf16.mxu0 0
  %936 = vmatpush1.bf16.msra.mxu0 0
  %937 = vmatprep.subr.bf16.mxu0 0
  %938 = vmatpush1.bf16.msra.mxu0 0
  %939 = vmatprep.subr.bf16.mxu0 0
  %940 = vmatpush1.bf16.msra.mxu0 0
  %941 = vmatprep.subr.bf16.mxu0 0
  %942 = vmatpush1.bf16.msra.mxu0 0
  %943 = vmatprep.subr.bf16.mxu0 0
  %944 = vmatpush1.bf16.msra.mxu0 0
  %945 = vmatprep.subr.bf16.mxu0 0
  %946 = vmatpush1.bf16.msra.mxu0 0
  %947 = vmatprep.subr.bf16.mxu0 0
  %948 = vmatpush1.bf16.msra.mxu0 0
  %949 = vmatprep.subr.bf16.mxu0 0
  %950 = vmatpush1.bf16.msra.mxu0 0
  %951 = vmatprep.subr.bf16.mxu0 0
  %952 = vmatpush1.bf16.msra.mxu0 0
  %953 = vmatprep.subr.bf16.mxu0 0
  %954 = vmatpush1.bf16.msra.mxu0 0
  %955 = vmatprep.subr.bf16.mxu0 0
  %956 = vmatpush1.bf16.msra.mxu0 0
  %957 = vmatprep.subr.bf16.mxu0 0
  %958 = vmatpush1.bf16.msra.mxu0 0
  %959 = vmatprep.mubr.bf16.mxu0 0
  %960 = vmatmul.mubr.bf16.gmra.mrb[0].mxu0 %v910
  %v961 = vpop.f32.mrb[0].mxu0
  %v962 = vadd.f32 0.0, %v961
  %v963 = vpop.f32.mrb[0].mxu0
  %v964 = vadd.f32 0.0, %v963
  %v965 = vpop.f32.mrb[0].mxu0
  %v966 = vadd.f32 0.0, %v965
  %v967 = vpop.f32.mrb[0].mxu0
  %v968 = vadd.f32 0.0, %v967
  %969 = vmatprep.mubr.bf16.mxu0 0
  %970 = vmatmul.mubr.bf16.gmra.mrb[0].mxu0 %v913
  %v971 = vpop.f32.mrb[0].mxu0
  %v972 = vadd.f32 0.0, %v971
  %v973 = vpop.f32.mrb[0].mxu0
  %v974 = vadd.f32 0.0, %v973
  %v975 = vpop.f32.mrb[0].mxu0
  %v976 = vadd.f32 0.0, %v975
  %v977 = vpop.f32.mrb[0].mxu0
  %v978 = vadd.f32 0.0, %v977
  %979 = vdwg.mxu0
  %980 = vmatprep.subr.bf16.mxu0 %v925
  %981 = vmatpush1.bf16.msra.mxu0 %v922
  %982 = vmatprep.subr.bf16.mxu0 0
  %983 = vmatpush1.bf16.msra.mxu0 0
  %984 = vmatprep.subr.bf16.mxu0 0
  %985 = vmatpush1.bf16.msra.mxu0 0
  %986 = vmatprep.subr.bf16.mxu0 0
  %987 = vmatpush1.bf16.msra.mxu0 0
  %988 = vmatprep.subr.bf16.mxu0 0
  %989 = vmatpush1.bf16.msra.mxu0 0
  %990 = vmatprep.subr.bf16.mxu0 0
  %991 = vmatpush1.bf16.msra.mxu0 0
  %992 = vmatprep.subr.bf16.mxu0 0
  %993 = vmatpush1.bf16.msra.mxu0 0
  %994 = vmatprep.subr.bf16.mxu0 0
  %995 = vmatpush1.bf16.msra.mxu0 0
  %996 = vmatprep.subr.bf16.mxu0 0
  %997 = vmatpush1.bf16.msra.mxu0 0
  %998 = vmatprep.subr.bf16.mxu0 0
  %999 = vmatpush1.bf16.msra.mxu0 0
  %1000 = vmatprep.subr.bf16.mxu0 0
  %1001 = vmatpush1.bf16.msra.mxu0 0
  %1002 = vmatprep.subr.bf16.mxu0 0
  %1003 = vmatpush1.bf16.msra.mxu0 0
  %1004 = vmatprep.subr.bf16.mxu0 0
  %1005 = vmatpush1.bf16.msra.mxu0 0
  %1006 = vmatprep.subr.bf16.mxu0 0
  %1007 = vmatpush1.bf16.msra.mxu0 0
  %1008 = vmatprep.subr.bf16.mxu0 0
  %1009 = vmatpush1.bf16.msra.mxu0 0
  %1010 = vmatprep.subr.bf16.mxu0 0
  %1011 = vmatpush1.bf16.msra.mxu0 0
  %1012 = vmatprep.mubr.bf16.mxu0 0
  %1013 = vmatmul.mubr.bf16.gmra.mrb[0].mxu0 %v910
  %v1014 = vpop.f32.mrb[0].mxu0
  %v1015 = vadd.f32 0.0, %v1014
  %v1016 = vpop.f32.mrb[0].mxu0
  %v1017 = vadd.f32 0.0, %v1016
  %v1018 = vpop.f32.mrb[0].mxu0
  %v1019 = vadd.f32 0.0, %v1018
  %v1020 = vpop.f32.mrb[0].mxu0
  %v1021 = vadd.f32 0.0, %v1020
  %1022 = vmatprep.mubr.bf16.mxu0 0
  %1023 = vmatmul.mubr.bf16.gmra.mrb[0].mxu0 %v913
  %v1024 = vpop.f32.mrb[0].mxu0
  %v1025 = vadd.f32 0.0, %v1024
  %v1026 = vpop.f32.mrb[0].mxu0
  %v1027 = vadd.f32 0.0, %v1026
  %v1028 = vpop.f32.mrb[0].mxu0
  %v1029 = vadd.f32 0.0, %v1028
  %v1030 = vpop.f32.mrb[0].mxu0
  %v1031 = vadd.f32 0.0, %v1030
  %1032 = vdwg.mxu0
  %v1033 = vadd.f32 %v659, %v962
  %v1034 = vadd.f32 %v661, %v964
  %v1035 = vadd.f32 %v712, %v1015
  %v1036 = vadd.f32 %v714, %v1017
  %v1037 = vadd.f32 %v663, %v966
  %v1038 = vadd.f32 %v665, %v968
  %v1039 = vadd.f32 %v716, %v1019
  %v1040 = vadd.f32 %v718, %v1021
  %v1041 = vadd.f32 %v669, %v972
  %v1042 = vadd.f32 %v671, %v974
  %v1043 = vadd.f32 %v722, %v1025
  %v1044 = vadd.f32 %v724, %v1027
  %v1045 = vadd.f32 %v673, %v976
  %v1046 = vadd.f32 %v675, %v978
  %v1047 = vadd.f32 %v726, %v1029
  %v1048 = vadd.f32 %v728, %v1031
  %1049 = vrot.lane.b32.xlu0 %v886, 126
  %v1050 = vpop.permute.xlu0 %1049
  %1051 = vrot.lane.b32.xlu0 %v887, 126
  %v1052 = vpop.permute.xlu0 %1051
  %1053 = vrot.lane.b32.xlu0 %v888, 126
  %v1054 = vpop.permute.xlu0 %1053
  %1055 = vrot.lane.b32.xlu0 %v889, 126
  %v1056 = vpop.permute.xlu0 %1055
  %v1057 = vsel %vm163, %v1054, %v1056
  %v1058 = vsel %vm163, %v1052, %v1054
  %v1059 = vsel %vm163, %v1050, %v1052
  %v1060 = vsel %vm163, %v1056, %v1050
  %v1061 = vadd.f32 %v1059, %v171
  %v1062 = vadd.f32 %v1058, %v175
  %v1063 = vadd.f32 %v1057, %v179
  %v1064 = vadd.f32 %v1060, %v183
  %v1065 = vmax.f32 %v886, %v1061
  %v1066 = vmax.f32 %v887, %v1062
  %v1067 = vmax.f32 %v888, %v1063
  %v1068 = vmax.f32 %v889, %v1064
  %1069 = vrot.lane.b32.xlu0 %v886, 127
  %v1070 = vpop.permute.xlu0 %1069
  %1071 = vrot.lane.b32.xlu0 %v887, 127
  %v1072 = vpop.permute.xlu0 %1071
  %1073 = vrot.lane.b32.xlu0 %v888, 127
  %v1074 = vpop.permute.xlu0 %1073
  %1075 = vrot.lane.b32.xlu0 %v889, 127
  %v1076 = vpop.permute.xlu0 %1075
  %v1077 = vsel %vm200, %v1074, %v1076
  %v1078 = vsel %vm200, %v1072, %v1074
  %v1079 = vsel %vm200, %v1070, %v1072
  %v1080 = vsel %vm200, %v1076, %v1070
  %v1081 = vadd.f32 %v1079, %v208
  %v1082 = vadd.f32 %v1078, %v212
  %v1083 = vadd.f32 %v1077, %v216
  %v1084 = vadd.f32 %v1080, %v220
  %v1085 = vmax.f32 %v1065, %v1081
  %v1086 = vmax.f32 %v1066, %v1082
  %v1087 = vmax.f32 %v1067, %v1083
  %v1088 = vmax.f32 %v1068, %v1084
  %1089 = vrot.lane.b32.xlu0 %v886, 1
  %v1090 = vpop.permute.xlu0 %1089
  %1091 = vrot.lane.b32.xlu0 %v887, 1
  %v1092 = vpop.permute.xlu0 %1091
  %1093 = vrot.lane.b32.xlu0 %v888, 1
  %v1094 = vpop.permute.xlu0 %1093
  %1095 = vrot.lane.b32.xlu0 %v889, 1
  %v1096 = vpop.permute.xlu0 %1095
  %v1097 = vsel %vm237, %v1094, %v1096
  %v1098 = vsel %vm237, %v1092, %v1094
  %v1099 = vsel %vm237, %v1090, %v1092
  %v1100 = vsel %vm237, %v1096, %v1090
  %v1101 = vadd.f32 %v1100, %v245
  %v1102 = vadd.f32 %v1099, %v249
  %v1103 = vadd.f32 %v1098, %v253
  %v1104 = vadd.f32 %v1097, %v257
  %v1105 = vmax.f32 %v1085, %v1101
  %v1106 = vmax.f32 %v1086, %v1102
  %v1107 = vmax.f32 %v1087, %v1103
  %v1108 = vmax.f32 %v1088, %v1104
  %1109 = vrot.lane.b32.xlu0 %v886, 2
  %v1110 = vpop.permute.xlu0 %1109
  %1111 = vrot.lane.b32.xlu0 %v887, 2
  %v1112 = vpop.permute.xlu0 %1111
  %1113 = vrot.lane.b32.xlu0 %v888, 2
  %v1114 = vpop.permute.xlu0 %1113
  %1115 = vrot.lane.b32.xlu0 %v889, 2
  %v1116 = vpop.permute.xlu0 %1115
  %v1117 = vsel %vm274, %v1114, %v1116
  %v1118 = vsel %vm274, %v1112, %v1114
  %v1119 = vsel %vm274, %v1110, %v1112
  %v1120 = vsel %vm274, %v1116, %v1110
  %v1121 = vadd.f32 %v1120, %v282
  %v1122 = vadd.f32 %v1119, %v286
  %v1123 = vadd.f32 %v1118, %v290
  %v1124 = vadd.f32 %v1117, %v294
  %v1125 = vmax.f32 %v1105, %v1121
  %v1126 = vmax.f32 %v1106, %v1122
  %v1127 = vmax.f32 %v1107, %v1123
  %v1128 = vmax.f32 %v1108, %v1124
  %1129 = vrot.lane.b32.xlu0 %v1125, 96
  %v1130 = vpop.permute.xlu0 %1129
  %1131 = vrot.lane.b32.xlu0 %v1126, 96
  %v1132 = vpop.permute.xlu0 %1131
  %1133 = vrot.lane.b32.xlu0 %v1127, 96
  %v1134 = vpop.permute.xlu0 %1133
  %1135 = vrot.lane.b32.xlu0 %v1128, 96
  %v1136 = vpop.permute.xlu0 %1135
  %v1137 = vsel %vm311, %v1134, %v1136
  %v1138 = vsel %vm311, %v1132, %v1134
  %v1139 = vsel %vm311, %v1130, %v1132
  %v1140 = vsel %vm311, %v1136, %v1130
  %v1141 = vadd.f32 %v1139, %v319
  %v1142 = vadd.f32 %v1138, %v323
  %v1143 = vadd.f32 %v1137, %v327
  %v1144 = vadd.f32 %v1140, %v331
  %v1145 = vmax.f32 %v1125, %v1141
  %v1146 = vmax.f32 %v1126, %v1142
  %v1147 = vmax.f32 %v1127, %v1143
  %v1148 = vmax.f32 %v1128, %v1144
  %1149 = vrot.lane.b32.xlu0 %v1125, 112
  %v1150 = vpop.permute.xlu0 %1149
  %1151 = vrot.lane.b32.xlu0 %v1126, 112
  %v1152 = vpop.permute.xlu0 %1151
  %1153 = vrot.lane.b32.xlu0 %v1127, 112
  %v1154 = vpop.permute.xlu0 %1153
  %1155 = vrot.lane.b32.xlu0 %v1128, 112
  %v1156 = vpop.permute.xlu0 %1155
  %v1157 = vsel %vm348, %v1154, %v1156
  %v1158 = vsel %vm348, %v1152, %v1154
  %v1159 = vsel %vm348, %v1150, %v1152
  %v1160 = vsel %vm348, %v1156, %v1150
  %v1161 = vadd.f32 %v1159, %v356
  %v1162 = vadd.f32 %v1158, %v360
  %v1163 = vadd.f32 %v1157, %v364
  %v1164 = vadd.f32 %v1160, %v368
  %v1165 = vmax.f32 %v1145, %v1161
  %v1166 = vmax.f32 %v1146, %v1162
  %v1167 = vmax.f32 %v1147, %v1163
  %v1168 = vmax.f32 %v1148, %v1164
  %1169 = vrot.lane.b32.xlu0 %v1125, 16
  %v1170 = vpop.permute.xlu0 %1169
  %1171 = vrot.lane.b32.xlu0 %v1126, 16
  %v1172 = vpop.permute.xlu0 %1171
  %1173 = vrot.lane.b32.xlu0 %v1127, 16
  %v1174 = vpop.permute.xlu0 %1173
  %1175 = vrot.lane.b32.xlu0 %v1128, 16
  %v1176 = vpop.permute.xlu0 %1175
  %v1177 = vsel %vm385, %v1174, %v1176
  %v1178 = vsel %vm385, %v1172, %v1174
  %v1179 = vsel %vm385, %v1170, %v1172
  %v1180 = vsel %vm385, %v1176, %v1170
  %v1181 = vadd.f32 %v1180, %v393
  %v1182 = vadd.f32 %v1179, %v397
  %v1183 = vadd.f32 %v1178, %v401
  %v1184 = vadd.f32 %v1177, %v405
  %v1185 = vmax.f32 %v1165, %v1181
  %v1186 = vmax.f32 %v1166, %v1182
  %v1187 = vmax.f32 %v1167, %v1183
  %v1188 = vmax.f32 %v1168, %v1184
  %1189 = vrot.lane.b32.xlu0 %v1125, 32
  %v1190 = vpop.permute.xlu0 %1189
  %1191 = vrot.lane.b32.xlu0 %v1126, 32
  %v1192 = vpop.permute.xlu0 %1191
  %1193 = vrot.lane.b32.xlu0 %v1127, 32
  %v1194 = vpop.permute.xlu0 %1193
  %1195 = vrot.lane.b32.xlu0 %v1128, 32
  %v1196 = vpop.permute.xlu0 %1195
  %v1197 = vsel %vm422, %v1194, %v1196
  %v1198 = vsel %vm422, %v1192, %v1194
  %v1199 = vsel %vm422, %v1190, %v1192
  %v1200 = vsel %vm422, %v1196, %v1190
  %v1201 = vadd.f32 %v1200, %v430
  %v1202 = vadd.f32 %v1199, %v434
  %v1203 = vadd.f32 %v1198, %v438
  %v1204 = vadd.f32 %v1197, %v442
  %v1205 = vmax.f32 %v1185, %v1201
  %v1206 = vmax.f32 %v1186, %v1202
  %v1207 = vmax.f32 %v1187, %v1203
  %v1208 = vmax.f32 %v1188, %v1204
  %s1209 = scalar_lea.vmem %s2, 48
  %v1210 = vld [vmem:[%s1209] sm:$0xf]
  %v1211 = vld [vmem:[%s1209 + $0x4] sm:$0xf]
  %v1212 = vld [vmem:[%s1209 + $0x8] sm:$0xf]
  %v1213 = vld [vmem:[%s1209 + $0xc] sm:$0xf]
  %v1214 = vpack.c.bf16 %v1205, %v1205
  %v1215 = vpack.c.bf16 %v1206, %v1206
  %v1216 = vpack.c.bf16 %v1207, %v1207
  %v1217 = vpack.c.bf16 %v1208, %v1208
  %v1222 = vunpack.c.l.b16 %v1210
  %v1223 = vunpack.c.l.b16 %v1211
  %v1224 = vunpack.c.l.b16 %v1212
  %v1225 = vunpack.c.l.b16 %v1213
  %v1226 = vpack.c.b16 %v1223, %v1222
  %v1227 = vpack.c.b16 %v1225, %v1224
  %v1229 = vsel %vm470, %v1226, 0
  %v1232 = vsel %vm470, %v1227, 0
  %v1235 = vsel %vm477, %v1214, 0
  %v1238 = vsel %vm477, %v1215, 0
  %v1241 = vsel %vm477, %v1216, 0
  %v1244 = vsel %vm477, %v1217, 0
  %1246 = vmatprep.subr.bf16.mxu0 %v1238
  %1247 = vmatpush1.bf16.msra.mxu0 %v1235
  %1248 = vmatprep.subr.bf16.mxu0 0
  %1249 = vmatpush1.bf16.msra.mxu0 0
  %1250 = vmatprep.subr.bf16.mxu0 0
  %1251 = vmatpush1.bf16.msra.mxu0 0
  %1252 = vmatprep.subr.bf16.mxu0 0
  %1253 = vmatpush1.bf16.msra.mxu0 0
  %1254 = vmatprep.subr.bf16.mxu0 0
  %1255 = vmatpush1.bf16.msra.mxu0 0
  %1256 = vmatprep.subr.bf16.mxu0 0
  %1257 = vmatpush1.bf16.msra.mxu0 0
  %1258 = vmatprep.subr.bf16.mxu0 0
  %1259 = vmatpush1.bf16.msra.mxu0 0
  %1260 = vmatprep.subr.bf16.mxu0 0
  %1261 = vmatpush1.bf16.msra.mxu0 0
  %1262 = vmatprep.subr.bf16.mxu0 0
  %1263 = vmatpush1.bf16.msra.mxu0 0
  %1264 = vmatprep.subr.bf16.mxu0 0
  %1265 = vmatpush1.bf16.msra.mxu0 0
  %1266 = vmatprep.subr.bf16.mxu0 0
  %1267 = vmatpush1.bf16.msra.mxu0 0
  %1268 = vmatprep.subr.bf16.mxu0 0
  %1269 = vmatpush1.bf16.msra.mxu0 0
  %1270 = vmatprep.subr.bf16.mxu0 0
  %1271 = vmatpush1.bf16.msra.mxu0 0
  %1272 = vmatprep.subr.bf16.mxu0 0
  %1273 = vmatpush1.bf16.msra.mxu0 0
  %1274 = vmatprep.subr.bf16.mxu0 0
  %1275 = vmatpush1.bf16.msra.mxu0 0
  %1276 = vmatprep.subr.bf16.mxu0 0
  %1277 = vmatpush1.bf16.msra.mxu0 0
  %1278 = vmatprep.mubr.bf16.mxu0 0
  %1279 = vmatmul.mubr.bf16.gmra.mrb[0].mxu0 %v1229
  %v1280 = vpop.f32.mrb[0].mxu0
  %v1281 = vadd.f32 0.0, %v1280
  %v1282 = vpop.f32.mrb[0].mxu0
  %v1283 = vadd.f32 0.0, %v1282
  %v1284 = vpop.f32.mrb[0].mxu0
  %v1285 = vadd.f32 0.0, %v1284
  %v1286 = vpop.f32.mrb[0].mxu0
  %v1287 = vadd.f32 0.0, %v1286
  %1288 = vmatprep.mubr.bf16.mxu0 0
  %1289 = vmatmul.mubr.bf16.gmra.mrb[0].mxu0 %v1232
  %v1290 = vpop.f32.mrb[0].mxu0
  %v1291 = vadd.f32 0.0, %v1290
  %v1292 = vpop.f32.mrb[0].mxu0
  %v1293 = vadd.f32 0.0, %v1292
  %v1294 = vpop.f32.mrb[0].mxu0
  %v1295 = vadd.f32 0.0, %v1294
  %v1296 = vpop.f32.mrb[0].mxu0
  %v1297 = vadd.f32 0.0, %v1296
  %1298 = vdwg.mxu0
  %1299 = vmatprep.subr.bf16.mxu0 %v1244
  %1300 = vmatpush1.bf16.msra.mxu0 %v1241
  %1301 = vmatprep.subr.bf16.mxu0 0
  %1302 = vmatpush1.bf16.msra.mxu0 0
  %1303 = vmatprep.subr.bf16.mxu0 0
  %1304 = vmatpush1.bf16.msra.mxu0 0
  %1305 = vmatprep.subr.bf16.mxu0 0
  %1306 = vmatpush1.bf16.msra.mxu0 0
  %1307 = vmatprep.subr.bf16.mxu0 0
  %1308 = vmatpush1.bf16.msra.mxu0 0
  %1309 = vmatprep.subr.bf16.mxu0 0
  %1310 = vmatpush1.bf16.msra.mxu0 0
  %1311 = vmatprep.subr.bf16.mxu0 0
  %1312 = vmatpush1.bf16.msra.mxu0 0
  %1313 = vmatprep.subr.bf16.mxu0 0
  %1314 = vmatpush1.bf16.msra.mxu0 0
  %1315 = vmatprep.subr.bf16.mxu0 0
  %1316 = vmatpush1.bf16.msra.mxu0 0
  %1317 = vmatprep.subr.bf16.mxu0 0
  %1318 = vmatpush1.bf16.msra.mxu0 0
  %1319 = vmatprep.subr.bf16.mxu0 0
  %1320 = vmatpush1.bf16.msra.mxu0 0
  %1321 = vmatprep.subr.bf16.mxu0 0
  %1322 = vmatpush1.bf16.msra.mxu0 0
  %1323 = vmatprep.subr.bf16.mxu0 0
  %1324 = vmatpush1.bf16.msra.mxu0 0
  %1325 = vmatprep.subr.bf16.mxu0 0
  %1326 = vmatpush1.bf16.msra.mxu0 0
  %1327 = vmatprep.subr.bf16.mxu0 0
  %1328 = vmatpush1.bf16.msra.mxu0 0
  %1329 = vmatprep.subr.bf16.mxu0 0
  %1330 = vmatpush1.bf16.msra.mxu0 0
  %1331 = vmatprep.mubr.bf16.mxu0 0
  %1332 = vmatmul.mubr.bf16.gmra.mrb[0].mxu0 %v1229
  %v1333 = vpop.f32.mrb[0].mxu0
  %v1334 = vadd.f32 0.0, %v1333
  %v1335 = vpop.f32.mrb[0].mxu0
  %v1336 = vadd.f32 0.0, %v1335
  %v1337 = vpop.f32.mrb[0].mxu0
  %v1338 = vadd.f32 0.0, %v1337
  %v1339 = vpop.f32.mrb[0].mxu0
  %v1340 = vadd.f32 0.0, %v1339
  %1341 = vmatprep.mubr.bf16.mxu0 0
  %1342 = vmatmul.mubr.bf16.gmra.mrb[0].mxu0 %v1232
  %v1343 = vpop.f32.mrb[0].mxu0
  %v1344 = vadd.f32 0.0, %v1343
  %v1345 = vpop.f32.mrb[0].mxu0
  %v1346 = vadd.f32 0.0, %v1345
  %v1347 = vpop.f32.mrb[0].mxu0
  %v1348 = vadd.f32 0.0, %v1347
  %v1349 = vpop.f32.mrb[0].mxu0
  %v1350 = vadd.f32 0.0, %v1349
  %1351 = vdwg.mxu0
  %v1352 = vadd.f32 %v1033, %v1281
  %v1353 = vadd.f32 %v1034, %v1283
  %v1354 = vadd.f32 %v1035, %v1334
  %v1355 = vadd.f32 %v1036, %v1336
  %v1356 = vadd.f32 %v1037, %v1285
  %v1357 = vadd.f32 %v1038, %v1287
  %v1358 = vadd.f32 %v1039, %v1338
  %v1359 = vadd.f32 %v1040, %v1340
  %v1360 = vadd.f32 %v1041, %v1291
  %v1361 = vadd.f32 %v1042, %v1293
  %v1362 = vadd.f32 %v1043, %v1344
  %v1363 = vadd.f32 %v1044, %v1346
  %v1364 = vadd.f32 %v1045, %v1295
  %v1365 = vadd.f32 %v1046, %v1297
  %v1366 = vadd.f32 %v1047, %v1348
  %v1367 = vadd.f32 %v1048, %v1350
  %v1368 = vsub.f32 0.0, %v1352
  %v1369 = vsub.f32 0.0, %v1353
  %v1370 = vsub.f32 0.0, %v1354
  %v1371 = vsub.f32 0.0, %v1355
  %v1372 = vsub.f32 0.0, %v1356
  %v1373 = vsub.f32 0.0, %v1357
  %v1374 = vsub.f32 0.0, %v1358
  %v1375 = vsub.f32 0.0, %v1359
  %v1376 = vsub.f32 0.0, %v1360
  %v1377 = vsub.f32 0.0, %v1361
  %v1378 = vsub.f32 0.0, %v1362
  %v1379 = vsub.f32 0.0, %v1363
  %v1380 = vsub.f32 0.0, %v1364
  %v1381 = vsub.f32 0.0, %v1365
  %v1382 = vsub.f32 0.0, %v1366
  %v1383 = vsub.f32 0.0, %v1367
  %v1384 = vmul.f32 %v1368, 1.442695
  %v1385 = vpow.pop %v1384
  %v1386 = vmul.f32 %v1369, 1.442695
  %v1387 = vpow.pop %v1386
  %v1388 = vmul.f32 %v1370, 1.442695
  %v1389 = vpow.pop %v1388
  %v1390 = vmul.f32 %v1371, 1.442695
  %v1391 = vpow.pop %v1390
  %v1392 = vmul.f32 %v1372, 1.442695
  %v1393 = vpow.pop %v1392
  %v1394 = vmul.f32 %v1373, 1.442695
  %v1395 = vpow.pop %v1394
  %v1396 = vmul.f32 %v1374, 1.442695
  %v1397 = vpow.pop %v1396
  %v1398 = vmul.f32 %v1375, 1.442695
  %v1399 = vpow.pop %v1398
  %v1400 = vmul.f32 %v1376, 1.442695
  %v1401 = vpow.pop %v1400
  %v1402 = vmul.f32 %v1377, 1.442695
  %v1403 = vpow.pop %v1402
  %v1404 = vmul.f32 %v1378, 1.442695
  %v1405 = vpow.pop %v1404
  %v1406 = vmul.f32 %v1379, 1.442695
  %v1407 = vpow.pop %v1406
  %v1408 = vmul.f32 %v1380, 1.442695
  %v1409 = vpow.pop %v1408
  %v1410 = vmul.f32 %v1381, 1.442695
  %v1411 = vpow.pop %v1410
  %v1412 = vmul.f32 %v1382, 1.442695
  %v1413 = vpow.pop %v1412
  %v1414 = vmul.f32 %v1383, 1.442695
  %v1415 = vpow.pop %v1414
  %v1416 = vadd.f32 %v1385, 1.0
  %v1417 = vadd.f32 %v1387, 1.0
  %v1418 = vadd.f32 %v1389, 1.0
  %v1419 = vadd.f32 %v1391, 1.0
  %v1420 = vadd.f32 %v1393, 1.0
  %v1421 = vadd.f32 %v1395, 1.0
  %v1422 = vadd.f32 %v1397, 1.0
  %v1423 = vadd.f32 %v1399, 1.0
  %v1424 = vadd.f32 %v1401, 1.0
  %v1425 = vadd.f32 %v1403, 1.0
  %v1426 = vadd.f32 %v1405, 1.0
  %v1427 = vadd.f32 %v1407, 1.0
  %v1428 = vadd.f32 %v1409, 1.0
  %v1429 = vadd.f32 %v1411, 1.0
  %v1430 = vadd.f32 %v1413, 1.0
  %v1431 = vadd.f32 %v1415, 1.0
  %v1432 = vrcp.pop %v1416
  %v1433 = vrcp.pop %v1417
  %v1434 = vrcp.pop %v1418
  %v1435 = vrcp.pop %v1419
  %v1436 = vrcp.pop %v1420
  %v1437 = vrcp.pop %v1421
  %v1438 = vrcp.pop %v1422
  %v1439 = vrcp.pop %v1423
  %v1440 = vrcp.pop %v1424
  %v1441 = vrcp.pop %v1425
  %v1442 = vrcp.pop %v1426
  %v1443 = vrcp.pop %v1427
  %v1444 = vrcp.pop %v1428
  %v1445 = vrcp.pop %v1429
  %v1446 = vrcp.pop %v1430
  %v1447 = vrcp.pop %v1431
  %v1448 = vmul.f32 %v1352, %v1432
  %v1449 = vmul.f32 %v1353, %v1433
  %v1450 = vmul.f32 %v1354, %v1434
  %v1451 = vmul.f32 %v1355, %v1435
  %v1452 = vmul.f32 %v1356, %v1436
  %v1453 = vmul.f32 %v1357, %v1437
  %v1454 = vmul.f32 %v1358, %v1438
  %v1455 = vmul.f32 %v1359, %v1439
  %v1456 = vmul.f32 %v1360, %v1440
  %v1457 = vmul.f32 %v1361, %v1441
  %v1458 = vmul.f32 %v1362, %v1442
  %v1459 = vmul.f32 %v1363, %v1443
  %v1460 = vmul.f32 %v1364, %v1444
  %v1461 = vmul.f32 %v1365, %v1445
  %v1462 = vmul.f32 %v1366, %v1446
  %v1463 = vmul.f32 %v1367, %v1447
  %1464 = vst [vmem:[%s4] sm:$0xff] %v1448
  %1465 = vst [vmem:[%s4 + $0x8] sm:$0xff] %v1449
  %1466 = vst [vmem:[%s4 + $0x10] sm:$0xff] %v1450
  %1467 = vst [vmem:[%s4 + $0x18] sm:$0xff] %v1451
  %1468 = vst [vmem:[%s4 + $0x20] sm:$0xff] %v1452
  %1469 = vst [vmem:[%s4 + $0x28] sm:$0xff] %v1453
  %1470 = vst [vmem:[%s4 + $0x30] sm:$0xff] %v1454
  %1471 = vst [vmem:[%s4 + $0x38] sm:$0xff] %v1455
  %1472 = vst [vmem:[%s4 + $0x40] sm:$0xff] %v1456
  %1473 = vst [vmem:[%s4 + $0x48] sm:$0xff] %v1457
  %1474 = vst [vmem:[%s4 + $0x50] sm:$0xff] %v1458
  %1475 = vst [vmem:[%s4 + $0x58] sm:$0xff] %v1459
  %1476 = vst [vmem:[%s4 + $0x60] sm:$0xff] %v1460
  %1477 = vst [vmem:[%s4 + $0x68] sm:$0xff] %v1461
  %1478 = vst [vmem:[%s4 + $0x70] sm:$0xff] %v1462
  %1479 = vst [vmem:[%s4 + $0x78] sm:$0xff] %v1463
  // Predicated region
  $region18: #{sppf_forward.1} parent=0 // pred_check
    _
  $region19: #{sppf_forward.1} parent=0 // pred_check_branch
    %1481 = sbr.rel (0) target = $region21
  $region20: #{sppf_forward.1} parent=0 // pred_region
    _
  $region21: #{sppf_forward.1} parent=0 // pred_fallthru
    _
  // Predicated region
  $region22: #{sppf_forward.1} parent=0 // pred_check
    _
  $region23: #{sppf_forward.1} parent=0 // pred_check_branch
    %1483 = sbr.rel (0) target = $region25
  $region24: #{sppf_forward.1} parent=0 // pred_region
    _
  $region25: #{sppf_forward.1} parent=0 // pred_fallthru
    _

</llo_original>
